<compile_context>
chip_gen: v5e
topology: v5e:2x2
jax: 0.10.0
libtpu: 0.0.40
codegen_flags: <defaults>
</compile_context>

<pallas_src>
import jax
import jax.numpy as jnp
from jax import lax
from jax.experimental import pallas as pl
from jax.experimental.pallas import tpu as pltpu


# ---------------------------------------------------------------------------
# 3x3 tap validity masks (zero padding border), tiled across the batch axis.
# ---------------------------------------------------------------------------
def make_tap_masks(H, W):
    """(9, H*W) validity masks for the 9 shifted taps of a pad=1 3x3 conv."""
    idx = jnp.arange(H * W, dtype=jnp.int32)
    i, j = idx // W, idx % W
    rows = []
    for tap in range(9):
        di, dj = tap // 3 - 1, tap % 3 - 1
        valid = (i + di >= 0) & (i + di < H) & (j + dj >= 0) & (j + dj < W)
        rows.append(valid.astype(jnp.float32))
    return jnp.stack(rows, axis=0)


# ---------------------------------------------------------------------------
# Fused conv3x3 (pad=1) + bias + ReLU on a single (C, B*HW) slab.
# ---------------------------------------------------------------------------
def _make_conv_kernel(W):
    def kernel(x_ref, w_ref, b_ref, m_ref, o_ref):
        x = x_ref[...]                                   # (C, B*HW) f32
        total = x.shape[1]
        acc = jnp.zeros(o_ref.shape, jnp.float32)
        for tap in range(9):                             # static unroll
            di, dj = tap // 3 - 1, tap % 3 - 1
            s = di * W + dj                              # shift in flat coords
            if s == 0:
                col = x
            else:
                col = pltpu.roll(x, shift=(-s) % total, axis=1)
                # zero pixels that wrapped across an image border
                col = col * m_ref[pl.ds(tap, 1), :]
            acc = acc + jnp.dot(w_ref[tap], col,
                                preferred_element_type=jnp.float32)
        o_ref[...] = jnp.maximum(acc + b_ref[...], 0.0)  # fused bias + ReLU
    return kernel


def conv3x3_relu(x_flat, w, b, W, masks):
    """x_flat: (C, B*HW) f32 -> (O, B*HW) f32."""
    C, total = x_flat.shape
    O = w.shape[0]
    # (O, C, 3, 3) -> (9, O, C) so w_t[tap, o, c] == w[o, c, tap//3, tap%3]
    w_t = jnp.transpose(w.reshape(O, C, 9), (2, 0, 1)).astype(jnp.float32)
    b2 = b.reshape(O, 1).astype(jnp.float32)
    return pl.pallas_call(
        _make_conv_kernel(W),
        out_shape=jax.ShapeDtypeStruct((O, total), jnp.float32),
        grid=(1,),
        in_specs=[
            pl.BlockSpec((C, total), lambda i: (0, 0)),
            pl.BlockSpec((9, O, C), lambda i: (0, 0, 0)),
            pl.BlockSpec((O, 1), lambda i: (0, 0)),
            pl.BlockSpec((9, total), lambda i: (0, 0)),
        ],
        out_specs=pl.BlockSpec((O, total), lambda i: (0, 0)),
        compiler_params=pltpu.CompilerParams(
            dimension_semantics=("arbitrary",)),
    )(x_flat, w_t, b2, masks)


# ---------------------------------------------------------------------------
# One fused loss kernel: pixel L1 sum + per-layer feature L1 sums + per-layer
# gram L1 sums.  Grid over batch images; SMEM scalar accumulators.
# ---------------------------------------------------------------------------
def _make_loss_kernel(num_slabs, want_gram):
    def kernel(*refs):
        in_refs = refs[:2 * num_slabs]
        feat_ref = refs[2 * num_slabs]      # (1, num_slabs)  SMEM
        gram_ref = refs[2 * num_slabs + 1]  # (1, n_gram)     SMEM
        n = pl.program_id(0)

        @pl.when(n == 0)
        def _():
            for l in range(feat_ref.shape[1]):
                feat_ref[0, l] = 0.0
            for g in range(gram_ref.shape[1]):
                gram_ref[0, g] = 0.0

        g = 0
        for l in range(num_slabs):
            fi = in_refs[2 * l][...]        # (C_l, HW) input image n
            fo = in_refs[2 * l + 1][...]    # (C_l, HW) target image n
            feat_ref[0, l] += jnp.sum(jnp.abs(fi - fo))
            if want_gram[l]:
                # gram = f @ f^T contracting the HW axis (no transpose)
                gi = lax.dot_general(fi, fi, (((1,), (1,)), ((), ())),
                                     preferred_element_type=jnp.float32)
                go = lax.dot_general(fo, fo, (((1,), (1,)), ((), ())),
                                     preferred_element_type=jnp.float32)
                gram_ref[0, g] += jnp.sum(jnp.abs(gi - go))
                g += 1
    return kernel


def fused_losses(slabs, want_gram, n_img, HW):
    """slabs: list of (C_l, 2*n_img*HW) arrays (input images first).

    Returns (feat_sums (1, len(slabs)), gram_sums (1, #want_gram))."""
    num_slabs = len(slabs)
    n_gram = max(sum(want_gram), 1)
    in_specs, args = [], []
    for f in slabs:
        C, _ = f.shape
        in_specs.append(pl.BlockSpec((C, HW), lambda n: (0, n)))
        in_specs.append(pl.BlockSpec((C, HW), lambda n, _o=n_img: (0, n + _o)))
        args += [f, f]
    feat_sums, gram_sums = pl.pallas_call(
        _make_loss_kernel(num_slabs, want_gram),
        out_shape=(jax.ShapeDtypeStruct((1, num_slabs), jnp.float32),
                   jax.ShapeDtypeStruct((1, n_gram), jnp.float32)),
        grid=(n_img,),
        in_specs=in_specs,
        out_specs=(
            pl.BlockSpec((1, num_slabs), lambda n: (0, 0),
                         memory_space=pltpu.MemorySpace.SMEM),
            pl.BlockSpec((1, n_gram), lambda n: (0, 0),
                         memory_space=pltpu.MemorySpace.SMEM),
        ),
        compiler_params=pltpu.CompilerParams(
            dimension_semantics=("arbitrary",)),          # accumulating axis
    )(*args)
    return feat_sums, gram_sums


# ---------------------------------------------------------------------------
# FeatureLoss: same forward semantics as the PyTorch module.
# ---------------------------------------------------------------------------
class FeatureLoss:
    """JAX/Pallas re-implementation of the PyTorch FeatureLoss forward pass."""

    def __init__(self, m_feat_params, layer_ids, layer_wgts):
        self.params = m_feat_params          # list of (w, b) conv3x3 layers
        self.layer_ids = list(layer_ids)
        self.wgts = list(layer_wgts)
        self.metric_names = (['pixel']
                             + [f'feat_{i}' for i in range(len(layer_ids))]
                             + [f'gram_{i}' for i in range(len(layer_ids))])
        # TODO(synk): fastai hook_outputs / nn.Module bookkeeping is host-side
        # glue; features are collected directly from the layer loop below.

    def make_features(self, x_flat, W, masks):
        cur = x_flat
        feats = []
        for idx, (wk, bk) in enumerate(self.params):
            cur = conv3x3_relu(cur, wk, bk, W, masks)
            if idx in self.layer_ids:
                feats.append(cur)
        return feats

    def forward(self, inp, target):
        n_img, c_in, h, w = inp.shape
        hw = h * w
        b = 2 * n_img
        # Single feature pass over concat(input, target); re-layout once to the
        # lane-dense (C, B*HW) slab every kernel consumes.
        x_all = jnp.concatenate([inp, target], axis=0)            # (B, C, H, W)
        x_flat = jnp.transpose(x_all.reshape(b, c_in, hw),
                               (1, 0, 2)).reshape(c_in, b * hw).astype(jnp.float32)
        masks = jnp.tile(make_tap_masks(h, w), (1, b))             # (9, B*HW)

        feats = self.make_features(x_flat, w, masks)               # [(C_l, B*HW)]

        # One fused kernel: pixel L1 + per-layer feature L1 + per-layer gram L1.
        slabs = [x_flat] + feats
        want_gram = [False] + [True] * len(feats)
        feat_sums, gram_sums = fused_losses(slabs, want_gram, n_img, hw)

        pixel = feat_sums[0, 0] / float(n_img * c_in * hw)
        feat_terms, gram_terms = [], []
        for i, (f, wgt) in enumerate(zip(feats, self.wgts)):
            c_l = f.shape[0]
            fl = feat_sums[0, i + 1] / float(n_img * c_l * hw)
            gl = gram_sums[0, i] / float(c_l * hw) / float(n_img * c_l * c_l)
            feat_terms.append(fl * wgt)
            gram_terms.append(gl * (wgt ** 2) * 5000.0)

        feat_losses = [pixel] + feat_terms + gram_terms
        self.feat_losses = feat_losses
        self.metrics = dict(zip(self.metric_names, feat_losses))
        return sum(feat_losses)


# ---------------------------------------------------------------------------
if __name__ == "__main__":
    key = jax.random.PRNGKey(0)
    k_in, k_tg, k_w1, k_w2, k_w3 = jax.random.split(key, 5)

    # Deterministic synthetic "VGG-ish" feature extractor weights.
    chans = [(3, 8), (8, 16), (16, 16)]
    keys_w = [k_w1, k_w2, k_w3]
    params = []
    for (cin, cout), kw in zip(chans, keys_w):
        wk, bk = jax.random.split(kw)
        w = jax.random.normal(wk, (cout, cin, 3, 3), jnp.float32) * 0.1
        b = jax.random.normal(bk, (cout,), jnp.float32) * 0.05
        params.append((w, b))

    layer_ids = [0, 1, 2]
    layer_wgts = [5.0, 15.0, 2.0]

    fl = FeatureLoss(params, layer_ids, layer_wgts)

    inp = jax.random.normal(k_in, (2, 3, 16, 16), jnp.float32)
    tgt = jax.random.normal(k_tg, (2, 3, 16, 16), jnp.float32)

    loss = fl.forward(inp, tgt)
    jax.block_until_ready(loss)
    print("KERNEL_OK")
</pallas_src>

<mosaic_0001>
module attributes {stable_mosaic.version = 11 : i64} {
  func.func @kernel(%arg0: i32, %arg1: memref<3x1024xf32, #tpu.memory_space<vmem>>, %arg2: memref<9x8x3xf32, #tpu.memory_space<vmem>>, %arg3: memref<8x1xf32, #tpu.memory_space<vmem>>, %arg4: memref<9x1024xf32, #tpu.memory_space<vmem>>, %arg5: memref<8x1024xf32, #tpu.memory_space<vmem>>) attributes {dimension_semantics = [#tpu.dimension_semantics<arbitrary>], iteration_bounds = array<i64: 1>, scalar_prefetch = 0 : i64, scratch_operands = 0 : i64, tpu.core_type = #tpu.core_type<tc>, window_params = [{pipeline_mode = #tpu.pipeline_mode<synchronous>, transform_indices = @transform_0, window_bounds = array<i64: 3, 1024>}, {pipeline_mode = #tpu.pipeline_mode<synchronous>, transform_indices = @transform_1, window_bounds = array<i64: 9, 8, 3>}, {pipeline_mode = #tpu.pipeline_mode<synchronous>, transform_indices = @transform_2, window_bounds = array<i64: 8, 1>}, {pipeline_mode = #tpu.pipeline_mode<synchronous>, transform_indices = @transform_3, window_bounds = array<i64: 9, 1024>}, {pipeline_mode = #tpu.pipeline_mode<synchronous>, transform_indices = @transform_4, window_bounds = array<i64: 8, 1024>}]} {
    %c0 = arith.constant 0 : index
    %c0_0 = arith.constant 0 : index
    %0 = vector.load %arg1[%c0, %c0_0] : memref<3x1024xf32, #tpu.memory_space<vmem>>, vector<3x1024xf32>
    %cst = arith.constant 0.000000e+00 : f32
    %1 = vector.broadcast %cst : f32 to vector<8x1024xf32>
    %c17_i32 = arith.constant 17 : i32
    %2 = tpu.dynamic_rotate %0 by %c17_i32 dim 1 : vector<3x1024xf32>, i32 -> vector<3x1024xf32>
    %c0_1 = arith.constant 0 : index
    %c0_2 = arith.constant 0 : index
    %3 = vector.load %arg4[%c0_1, %c0_2] : memref<9x1024xf32, #tpu.memory_space<vmem>>, vector<1x1024xf32>
    %4 = vector.broadcast %3 : vector<1x1024xf32> to vector<3x1024xf32>
    %5 = arith.mulf %2, %4 : vector<3x1024xf32>
    %c0_3 = arith.constant 0 : index
    %c0_4 = arith.constant 0 : index
    %c0_5 = arith.constant 0 : index
    %6 = vector.load %arg2[%c0_3, %c0_4, %c0_5] : memref<9x8x3xf32, #tpu.memory_space<vmem>>, vector<1x8x3xf32>
    %7 = vector.shape_cast %6 : vector<1x8x3xf32> to vector<8x3xf32>
    %cst_6 = arith.constant dense<0.000000e+00> : vector<8x1024xf32>
    %8 = tpu.matmul %7, %5, %cst_6 {dimension_numbers = #tpu.dot_dimension_numbers<[1], [0], [0], [1], [0, 0, 1, 1], [], []>} : vector<8x3xf32>, vector<3x1024xf32>, vector<8x1024xf32> -> vector<8x1024xf32>
    %9 = arith.addf %1, %8 : vector<8x1024xf32>
    %c16_i32 = arith.constant 16 : i32
    %10 = tpu.dynamic_rotate %0 by %c16_i32 dim 1 : vector<3x1024xf32>, i32 -> vector<3x1024xf32>
    %c1 = arith.constant 1 : index
    %c0_7 = arith.constant 0 : index
    %11 = vector.load %arg4[%c1, %c0_7] : memref<9x1024xf32, #tpu.memory_space<vmem>>, vector<1x1024xf32>
    %12 = vector.broadcast %11 : vector<1x1024xf32> to vector<3x1024xf32>
    %13 = arith.mulf %10, %12 : vector<3x1024xf32>
    %c1_8 = arith.constant 1 : index
    %c0_9 = arith.constant 0 : index
    %c0_10 = arith.constant 0 : index
    %14 = vector.load %arg2[%c1_8, %c0_9, %c0_10] : memref<9x8x3xf32, #tpu.memory_space<vmem>>, vector<1x8x3xf32>
    %15 = vector.shape_cast %14 : vector<1x8x3xf32> to vector<8x3xf32>
    %cst_11 = arith.constant dense<0.000000e+00> : vector<8x1024xf32>
    %16 = tpu.matmul %15, %13, %cst_11 {dimension_numbers = #tpu.dot_dimension_numbers<[1], [0], [0], [1], [0, 0, 1, 1], [], []>} : vector<8x3xf32>, vector<3x1024xf32>, vector<8x1024xf32> -> vector<8x1024xf32>
    %17 = arith.addf %9, %16 : vector<8x1024xf32>
    %c15_i32 = arith.constant 15 : i32
    %18 = tpu.dynamic_rotate %0 by %c15_i32 dim 1 : vector<3x1024xf32>, i32 -> vector<3x1024xf32>
    %c2 = arith.constant 2 : index
    %c0_12 = arith.constant 0 : index
    %19 = vector.load %arg4[%c2, %c0_12] : memref<9x1024xf32, #tpu.memory_space<vmem>>, vector<1x1024xf32>
    %20 = vector.broadcast %19 : vector<1x1024xf32> to vector<3x1024xf32>
    %21 = arith.mulf %18, %20 : vector<3x1024xf32>
    %c2_13 = arith.constant 2 : index
    %c0_14 = arith.constant 0 : index
    %c0_15 = arith.constant 0 : index
    %22 = vector.load %arg2[%c2_13, %c0_14, %c0_15] : memref<9x8x3xf32, #tpu.memory_space<vmem>>, vector<1x8x3xf32>
    %23 = vector.shape_cast %22 : vector<1x8x3xf32> to vector<8x3xf32>
    %cst_16 = arith.constant dense<0.000000e+00> : vector<8x1024xf32>
    %24 = tpu.matmul %23, %21, %cst_16 {dimension_numbers = #tpu.dot_dimension_numbers<[1], [0], [0], [1], [0, 0, 1, 1], [], []>} : vector<8x3xf32>, vector<3x1024xf32>, vector<8x1024xf32> -> vector<8x1024xf32>
    %25 = arith.addf %17, %24 : vector<8x1024xf32>
    %c1_i32 = arith.constant 1 : i32
    %26 = tpu.dynamic_rotate %0 by %c1_i32 dim 1 : vector<3x1024xf32>, i32 -> vector<3x1024xf32>
    %c3 = arith.constant 3 : index
    %c0_17 = arith.constant 0 : index
    %27 = vector.load %arg4[%c3, %c0_17] : memref<9x1024xf32, #tpu.memory_space<vmem>>, vector<1x1024xf32>
    %28 = vector.broadcast %27 : vector<1x1024xf32> to vector<3x1024xf32>
    %29 = arith.mulf %26, %28 : vector<3x1024xf32>
    %c3_18 = arith.constant 3 : index
    %c0_19 = arith.constant 0 : index
    %c0_20 = arith.constant 0 : index
    %30 = vector.load %arg2[%c3_18, %c0_19, %c0_20] : memref<9x8x3xf32, #tpu.memory_space<vmem>>, vector<1x8x3xf32>
    %31 = vector.shape_cast %30 : vector<1x8x3xf32> to vector<8x3xf32>
    %cst_21 = arith.constant dense<0.000000e+00> : vector<8x1024xf32>
    %32 = tpu.matmul %31, %29, %cst_21 {dimension_numbers = #tpu.dot_dimension_numbers<[1], [0], [0], [1], [0, 0, 1, 1], [], []>} : vector<8x3xf32>, vector<3x1024xf32>, vector<8x1024xf32> -> vector<8x1024xf32>
    %33 = arith.addf %25, %32 : vector<8x1024xf32>
    %c4 = arith.constant 4 : index
    %c0_22 = arith.constant 0 : index
    %c0_23 = arith.constant 0 : index
    %34 = vector.load %arg2[%c4, %c0_22, %c0_23] : memref<9x8x3xf32, #tpu.memory_space<vmem>>, vector<1x8x3xf32>
    %35 = vector.shape_cast %34 : vector<1x8x3xf32> to vector<8x3xf32>
    %cst_24 = arith.constant dense<0.000000e+00> : vector<8x1024xf32>
    %36 = tpu.matmul %35, %0, %cst_24 {dimension_numbers = #tpu.dot_dimension_numbers<[1], [0], [0], [1], [0, 0, 1, 1], [], []>} : vector<8x3xf32>, vector<3x1024xf32>, vector<8x1024xf32> -> vector<8x1024xf32>
    %37 = arith.addf %33, %36 : vector<8x1024xf32>
    %c1023_i32 = arith.constant 1023 : i32
    %38 = tpu.dynamic_rotate %0 by %c1023_i32 dim 1 : vector<3x1024xf32>, i32 -> vector<3x1024xf32>
    %c5 = arith.constant 5 : index
    %c0_25 = arith.constant 0 : index
    %39 = vector.load %arg4[%c5, %c0_25] : memref<9x1024xf32, #tpu.memory_space<vmem>>, vector<1x1024xf32>
    %40 = vector.broadcast %39 : vector<1x1024xf32> to vector<3x1024xf32>
    %41 = arith.mulf %38, %40 : vector<3x1024xf32>
    %c5_26 = arith.constant 5 : index
    %c0_27 = arith.constant 0 : index
    %c0_28 = arith.constant 0 : index
    %42 = vector.load %arg2[%c5_26, %c0_27, %c0_28] : memref<9x8x3xf32, #tpu.memory_space<vmem>>, vector<1x8x3xf32>
    %43 = vector.shape_cast %42 : vector<1x8x3xf32> to vector<8x3xf32>
    %cst_29 = arith.constant dense<0.000000e+00> : vector<8x1024xf32>
    %44 = tpu.matmul %43, %41, %cst_29 {dimension_numbers = #tpu.dot_dimension_numbers<[1], [0], [0], [1], [0, 0, 1, 1], [], []>} : vector<8x3xf32>, vector<3x1024xf32>, vector<8x1024xf32> -> vector<8x1024xf32>
    %45 = arith.addf %37, %44 : vector<8x1024xf32>
    %c1009_i32 = arith.constant 1009 : i32
    %46 = tpu.dynamic_rotate %0 by %c1009_i32 dim 1 : vector<3x1024xf32>, i32 -> vector<3x1024xf32>
    %c6 = arith.constant 6 : index
    %c0_30 = arith.constant 0 : index
    %47 = vector.load %arg4[%c6, %c0_30] : memref<9x1024xf32, #tpu.memory_space<vmem>>, vector<1x1024xf32>
    %48 = vector.broadcast %47 : vector<1x1024xf32> to vector<3x1024xf32>
    %49 = arith.mulf %46, %48 : vector<3x1024xf32>
    %c6_31 = arith.constant 6 : index
    %c0_32 = arith.constant 0 : index
    %c0_33 = arith.constant 0 : index
    %50 = vector.load %arg2[%c6_31, %c0_32, %c0_33] : memref<9x8x3xf32, #tpu.memory_space<vmem>>, vector<1x8x3xf32>
    %51 = vector.shape_cast %50 : vector<1x8x3xf32> to vector<8x3xf32>
    %cst_34 = arith.constant dense<0.000000e+00> : vector<8x1024xf32>
    %52 = tpu.matmul %51, %49, %cst_34 {dimension_numbers = #tpu.dot_dimension_numbers<[1], [0], [0], [1], [0, 0, 1, 1], [], []>} : vector<8x3xf32>, vector<3x1024xf32>, vector<8x1024xf32> -> vector<8x1024xf32>
    %53 = arith.addf %45, %52 : vector<8x1024xf32>
    %c1008_i32 = arith.constant 1008 : i32
    %54 = tpu.dynamic_rotate %0 by %c1008_i32 dim 1 : vector<3x1024xf32>, i32 -> vector<3x1024xf32>
    %c7 = arith.constant 7 : index
    %c0_35 = arith.constant 0 : index
    %55 = vector.load %arg4[%c7, %c0_35] : memref<9x1024xf32, #tpu.memory_space<vmem>>, vector<1x1024xf32>
    %56 = vector.broadcast %55 : vector<1x1024xf32> to vector<3x1024xf32>
    %57 = arith.mulf %54, %56 : vector<3x1024xf32>
    %c7_36 = arith.constant 7 : index
    %c0_37 = arith.constant 0 : index
    %c0_38 = arith.constant 0 : index
    %58 = vector.load %arg2[%c7_36, %c0_37, %c0_38] : memref<9x8x3xf32, #tpu.memory_space<vmem>>, vector<1x8x3xf32>
    %59 = vector.shape_cast %58 : vector<1x8x3xf32> to vector<8x3xf32>
    %cst_39 = arith.constant dense<0.000000e+00> : vector<8x1024xf32>
    %60 = tpu.matmul %59, %57, %cst_39 {dimension_numbers = #tpu.dot_dimension_numbers<[1], [0], [0], [1], [0, 0, 1, 1], [], []>} : vector<8x3xf32>, vector<3x1024xf32>, vector<8x1024xf32> -> vector<8x1024xf32>
    %61 = arith.addf %53, %60 : vector<8x1024xf32>
    %c1007_i32 = arith.constant 1007 : i32
    %62 = tpu.dynamic_rotate %0 by %c1007_i32 dim 1 : vector<3x1024xf32>, i32 -> vector<3x1024xf32>
    %c8 = arith.constant 8 : index
    %c0_40 = arith.constant 0 : index
    %63 = vector.load %arg4[%c8, %c0_40] : memref<9x1024xf32, #tpu.memory_space<vmem>>, vector<1x1024xf32>
    %64 = vector.broadcast %63 : vector<1x1024xf32> to vector<3x1024xf32>
    %65 = arith.mulf %62, %64 : vector<3x1024xf32>
    %c8_41 = arith.constant 8 : index
    %c0_42 = arith.constant 0 : index
    %c0_43 = arith.constant 0 : index
    %66 = vector.load %arg2[%c8_41, %c0_42, %c0_43] : memref<9x8x3xf32, #tpu.memory_space<vmem>>, vector<1x8x3xf32>
    %67 = vector.shape_cast %66 : vector<1x8x3xf32> to vector<8x3xf32>
    %cst_44 = arith.constant dense<0.000000e+00> : vector<8x1024xf32>
    %68 = tpu.matmul %67, %65, %cst_44 {dimension_numbers = #tpu.dot_dimension_numbers<[1], [0], [0], [1], [0, 0, 1, 1], [], []>} : vector<8x3xf32>, vector<3x1024xf32>, vector<8x1024xf32> -> vector<8x1024xf32>
    %69 = arith.addf %61, %68 : vector<8x1024xf32>
    %c0_45 = arith.constant 0 : index
    %c0_46 = arith.constant 0 : index
    %70 = vector.load %arg3[%c0_45, %c0_46] : memref<8x1xf32, #tpu.memory_space<vmem>>, vector<8x1xf32>
    %71 = vector.broadcast %70 : vector<8x1xf32> to vector<8x1024xf32>
    %72 = arith.addf %69, %71 : vector<8x1024xf32>
    %cst_47 = arith.constant 0.000000e+00 : f32
    %73 = vector.broadcast %cst_47 : f32 to vector<8x1024xf32>
    %74 = arith.maximumf %72, %73 : vector<8x1024xf32>
    %c0_48 = arith.constant 0 : index
    %c0_49 = arith.constant 0 : index
    %75 = vector.load %arg5[%c0_48, %c0_49] : memref<8x1024xf32, #tpu.memory_space<vmem>>, vector<8x1024xf32>
    tpu.vector_store %arg5[%c0_48, %c0_49], %74 {strides = array<i32>} : memref<8x1024xf32, #tpu.memory_space<vmem>>, vector<8x1024xf32>,
    return
  }
  func.func @transform_0(%arg0: i32) -> (i32, i32) {
    %c0_i32 = arith.constant 0 : i32
    %c0_i32_0 = arith.constant 0 : i32
    %c0_i32_1 = arith.constant 0 : i32
    return %c0_i32, %c0_i32_0 : i32, i32
  }
  func.func @transform_1(%arg0: i32) -> (i32, i32, i32) {
    %c0_i32 = arith.constant 0 : i32
    %c0_i32_0 = arith.constant 0 : i32
    %c0_i32_1 = arith.constant 0 : i32
    %c0_i32_2 = arith.constant 0 : i32
    return %c0_i32, %c0_i32_0, %c0_i32_1 : i32, i32, i32
  }
  func.func @transform_2(%arg0: i32) -> (i32, i32) {
    %c0_i32 = arith.constant 0 : i32
    %c0_i32_0 = arith.constant 0 : i32
    %c0_i32_1 = arith.constant 0 : i32
    return %c0_i32, %c0_i32_0 : i32, i32
  }
  func.func @transform_3(%arg0: i32) -> (i32, i32) {
    %c0_i32 = arith.constant 0 : i32
    %c0_i32_0 = arith.constant 0 : i32
    %c0_i32_1 = arith.constant 0 : i32
    return %c0_i32, %c0_i32_0 : i32, i32
  }
  func.func @transform_4(%arg0: i32) -> (i32, i32) {
    %c0_i32 = arith.constant 0 : i32
    %c0_i32_0 = arith.constant 0 : i32
    %c0_i32_1 = arith.constant 0 : i32
    return %c0_i32, %c0_i32_0 : i32, i32
  }
}

</mosaic_0001>

<llo_original>
// kernel: tpu_custom_call.1
$region0: #{tpu_custom_call.1}
  #allocation0 [shape = 'u32[]', space=smem, size = 0x4, offset = 0x4, fixed_abs, tag = 'smem constant byte address 0x4 - core index']
  #allocation1 [shape = 'u32[72,128]{1,0:T(1,128)}', space=vmem, size = 0x9000, scoped, tag = 'internal scratch']
  %s0 = inlined_call_operand.vmem [shape: f32[3,1024], index: 0, kind: input, shape index: {}]
  %s1 = inlined_call_operand.vmem [shape: f32[9,8,3], index: 1, kind: input, shape index: {}]
  %s2 = inlined_call_operand.vmem [shape: f32[8,1], index: 2, kind: input, shape index: {}]
  %s3 = inlined_call_operand.hbm [shape: f32[9,1024], index: 3, kind: input, shape index: {}]
  %s4 = inlined_call_operand.hbm [shape: f32[8,1024], index: 4, kind: output, shape index: {}]
  %s5 = sld [smem:[#allocation0]]
  $region30: #{tpu_custom_call.1} parent=0
    _
  %s7 = ssub.s32 1, %s5
  %s8 = scalar_select 0, %s7, %s5
  $region1: #{tpu_custom_call.1} parent=0
    #allocation2 [shape = 'u8[65536]{0}', space=vmem, size = 0x10000, scoped, tag = 'input window, operand 3, single buffered']
    #allocation3 [shape = 's32[1]{0}', space=sflag, size = 0x4, scoped, tag = 'scoped memory for tpu_custom_call.1']
    #allocation4 [shape = 's32[1]{0}', space=sflag, size = 0x4, scoped, tag = 'scoped memory for tpu_custom_call.1']
    #allocation5 [shape = 'u8[32768]{0}', space=vmem, size = 0x8000, scoped, tag = 'output window, operand 0, single buffered']
    %9 = vsyncpa [#allocation3], 0
    %10 = vsyncpa [#allocation4], 0
    // Predicated region
    $region2: #{tpu_custom_call.1} parent=1 // pred_check
      _
    $region3: #{tpu_custom_call.1} parent=1 // pred_check_branch
      %12 = sbr.rel (0) target = $region5
    $region4: #{tpu_custom_call.1} parent=1 // pred_region
      _
    $region5: #{tpu_custom_call.1} parent=1 // pred_fallthru
      _
    // Predicated region
    $region6: #{tpu_custom_call.1} parent=1 // pred_check
      _
    $region7: #{tpu_custom_call.1} parent=1 // pred_check_branch
      %14 = sbr.rel (0) target = $region9
    $region8: #{tpu_custom_call.1} parent=1 // pred_region
      _
    $region9: #{tpu_custom_call.1} parent=1 // pred_fallthru
      _
    // Predicated region
    $region10: #{tpu_custom_call.1} parent=1 // pred_check
      _
    $region11: #{tpu_custom_call.1} parent=1 // pred_check_branch
      %16 = sbr.rel (0) target = $region13
    $region12: #{tpu_custom_call.1} parent=1 // pred_region
      _
    $region13: #{tpu_custom_call.1} parent=1 // pred_fallthru
      _
    // Predicated region
    $region14: #{tpu_custom_call.1} parent=1 // pred_check
      _
    $region15: #{tpu_custom_call.1} parent=1 // pred_check_branch
      %18 = sbr.rel (0) target = $region17
    $region16: #{tpu_custom_call.1} parent=1 // pred_region
      %20 = vsyncadd [#allocation3], 0
      %s21 = sshll.u32 %s3, 4
      %s22 = int_to_ptr.hbm [resolvable:$true] %s21
      %s23 = sshll.u32 [#allocation2], 4
      %s24 = int_to_ptr.vmem [resolvable:$true] %s23
      %29 = dma.hbm_to_vmem [thread:$0]  %s22, 2048, %s24, [#allocation3], 1024, 1024, 64
    $region17: #{tpu_custom_call.1} parent=1 // pred_fallthru
      _
    // Predicated region
    $region18: #{tpu_custom_call.1} parent=1 // pred_check
      _
    $region19: #{tpu_custom_call.1} parent=1 // pred_check_branch
      %31 = sbr.rel (0) target = $region21
    $region20: #{tpu_custom_call.1} parent=1 // pred_region
      %33 = dma.done [#allocation3], 2048
    $region21: #{tpu_custom_call.1} parent=1 // pred_fallthru
      _
    %v34 = vld [vmem:[%s0] sm:$0x77]
    %v35 = vld [vmem:[%s0 + $0x8] sm:$0x77]
    %v36 = vld [vmem:[%s0 + $0x10] sm:$0x77]
    %v37 = vld [vmem:[%s0 + $0x18] sm:$0x77]
    %42 = vst [vmem:[#allocation1] ss:$2 sm:$0xff] %v34
    %s43 = scalar_lea.vmem [#allocation1], 16
    %44 = vst [vmem:[%s43] ss:$2 sm:$0xff] %v35
    %s45 = scalar_lea.vmem [#allocation1], 32
    %46 = vst [vmem:[%s45] ss:$2 sm:$0xff] %v36
    %s47 = scalar_lea.vmem [#allocation1], 48
    %48 = vst [vmem:[%s47] ss:$2 sm:$0xff] %v37
    %v49 = vld.sshfl [vmem:[#allocation1] sm:$0xff pattern:$0x75316420]
    %v50 = vld.sshfl [vmem:[#allocation1 + $0x8] sm:$0xff pattern:$0x75316420]
    %v51 = vld.sshfl [vmem:[#allocation1 + $0x10] sm:$0xff pattern:$0x75316420]
    %v52 = vld.sshfl [vmem:[#allocation1 + $0x18] sm:$0xff pattern:$0x75316420]
    %v53 = vld.sshfl [vmem:[#allocation1 + $0x20] sm:$0xff pattern:$0x75316420]
    %v54 = vld.sshfl [vmem:[#allocation1 + $0x28] sm:$0xff pattern:$0x75316420]
    %v55 = vld.sshfl [vmem:[#allocation1 + $0x30] sm:$0xff pattern:$0x75316420]
    %v56 = vld.sshfl [vmem:[#allocation1 + $0x38] sm:$0xff pattern:$0x75316420]
    %65 = vrot.lane.b32.xlu0 %v49, 17
    %v66 = vpop.permute.xlu0 %65
    %67 = vrot.lane.b32.xlu0 %v50, 17
    %v68 = vpop.permute.xlu0 %67
    %69 = vrot.lane.b32.xlu0 %v51, 17
    %v70 = vpop.permute.xlu0 %69
    %71 = vrot.lane.b32.xlu0 %v52, 17
    %v72 = vpop.permute.xlu0 %71
    %73 = vrot.lane.b32.xlu0 %v53, 17
    %v74 = vpop.permute.xlu0 %73
    %75 = vrot.lane.b32.xlu0 %v54, 17
    %v76 = vpop.permute.xlu0 %75
    %77 = vrot.lane.b32.xlu0 %v55, 17
    %v78 = vpop.permute.xlu0 %77
    %79 = vrot.lane.b32.xlu0 %v56, 17
    %v80 = vpop.permute.xlu0 %79
    %v81 = vlaneseq
    %v82 = vand.u32 %v81, 127
    %vm83 = vcmp.lt.s32.totalorder %v82, 17
    %v84 = vsel %vm83, %v78, %v80
    %v85 = vsel %vm83, %v76, %v78
    %v86 = vsel %vm83, %v74, %v76
    %v87 = vsel %vm83, %v72, %v74
    %v88 = vsel %vm83, %v70, %v72
    %v89 = vsel %vm83, %v68, %v70
    %v90 = vsel %vm83, %v66, %v68
    %v91 = vsel %vm83, %v80, %v66
    %v92 = vld [vmem:[#allocation2] ss:$8 sm:$0xf]
    %v93 = vld [vmem:[#allocation2] ss:$8 sm:$0xf0]
    %v94 = vor.u32 %v92, %v93
    %v96 = vperm.slane %v94, 0
    %v97 = vperm.slane %v94, 1
    %v98 = vperm.slane %v94, 2
    %v99 = vperm.slane %v94, 3
    %v100 = vperm.slane %v94, 4
    %v101 = vperm.slane %v94, 5
    %v102 = vperm.slane %v94, 6
    %v103 = vperm.slane %v94, 7
    %v112 = vmul.f32 %v91, %v96
    %v113 = vmul.f32 %v90, %v97
    %v114 = vmul.f32 %v89, %v98
    %v115 = vmul.f32 %v88, %v99
    %v116 = vmul.f32 %v87, %v100
    %v117 = vmul.f32 %v86, %v101
    %v118 = vmul.f32 %v85, %v102
    %v119 = vmul.f32 %v84, %v103
    %v120 = vld [vmem:[%s1] sm:$0xff]
    %121 = vst [vmem:[#allocation1] ss:$2 sm:$0xff] %v34
    %s122 = scalar_lea.vmem [#allocation1], 16
    %123 = vst [vmem:[%s122] ss:$2 sm:$0xff] %v35
    %s124 = scalar_lea.vmem [#allocation1], 32
    %125 = vst [vmem:[%s124] ss:$2 sm:$0xff] %v36
    %s126 = scalar_lea.vmem [#allocation1], 48
    %127 = vst [vmem:[%s126] ss:$2 sm:$0xff] %v37
    %v128 = vld.sshfl [vmem:[#allocation1] sm:$0xff pattern:$0x75316420]
    %v129 = vld.sshfl [vmem:[#allocation1 + $0x8] sm:$0xff pattern:$0x75316420]
    %v130 = vld.sshfl [vmem:[#allocation1 + $0x10] sm:$0xff pattern:$0x75316420]
    %v131 = vld.sshfl [vmem:[#allocation1 + $0x18] sm:$0xff pattern:$0x75316420]
    %v132 = vld.sshfl [vmem:[#allocation1 + $0x20] sm:$0xff pattern:$0x75316420]
    %v133 = vld.sshfl [vmem:[#allocation1 + $0x28] sm:$0xff pattern:$0x75316420]
    %v134 = vld.sshfl [vmem:[#allocation1 + $0x30] sm:$0xff pattern:$0x75316420]
    %v135 = vld.sshfl [vmem:[#allocation1 + $0x38] sm:$0xff pattern:$0x75316420]
    %144 = vrot.lane.b32.xlu0 %v128, 16
    %v145 = vpop.permute.xlu0 %144
    %146 = vrot.lane.b32.xlu0 %v129, 16
    %v147 = vpop.permute.xlu0 %146
    %148 = vrot.lane.b32.xlu0 %v130, 16
    %v149 = vpop.permute.xlu0 %148
    %150 = vrot.lane.b32.xlu0 %v131, 16
    %v151 = vpop.permute.xlu0 %150
    %152 = vrot.lane.b32.xlu0 %v132, 16
    %v153 = vpop.permute.xlu0 %152
    %154 = vrot.lane.b32.xlu0 %v133, 16
    %v155 = vpop.permute.xlu0 %154
    %156 = vrot.lane.b32.xlu0 %v134, 16
    %v157 = vpop.permute.xlu0 %156
    %158 = vrot.lane.b32.xlu0 %v135, 16
    %v159 = vpop.permute.xlu0 %158
    %vm160 = vcmp.lt.s32.totalorder %v82, 16
    %v161 = vsel %vm160, %v157, %v159
    %v162 = vsel %vm160, %v155, %v157
    %v163 = vsel %vm160, %v153, %v155
    %v164 = vsel %vm160, %v151, %v153
    %v165 = vsel %vm160, %v149, %v151
    %v166 = vsel %vm160, %v147, %v149
    %v167 = vsel %vm160, %v145, %v147
    %v168 = vsel %vm160, %v159, %v145
    %s169 = scalar_lea.vmem [#allocation2], 1
    %v170 = vld [vmem:[%s169] ss:$8 sm:$0xf]
    %v171 = vld [vmem:[%s169] ss:$8 sm:$0xf0]
    %v172 = vor.u32 %v170, %v171
    %v174 = vperm.slane %v172, 0
    %v175 = vperm.slane %v172, 1
    %v176 = vperm.slane %v172, 2
    %v177 = vperm.slane %v172, 3
    %v178 = vperm.slane %v172, 4
    %v179 = vperm.slane %v172, 5
    %v180 = vperm.slane %v172, 6
    %v181 = vperm.slane %v172, 7
    %v190 = vmul.f32 %v168, %v174
    %v191 = vmul.f32 %v167, %v175
    %v192 = vmul.f32 %v166, %v176
    %v193 = vmul.f32 %v165, %v177
    %v194 = vmul.f32 %v164, %v178
    %v195 = vmul.f32 %v163, %v179
    %v196 = vmul.f32 %v162, %v180
    %v197 = vmul.f32 %v161, %v181
    %s198 = scalar_lea.vmem %s1, 8
    %v199 = vld [vmem:[%s198] sm:$0xff]
    %vm200 = vcmask 23552
    %v202 = vsel %vm200, %v199, 0
    %vm204 = vcmask 1042432
    %v206 = vsel %vm204, %v190, 0
    %v209 = vsel %vm204, %v191, 0
    %v212 = vsel %vm204, %v192, 0
    %v215 = vsel %vm204, %v193, 0
    %v218 = vsel %vm204, %v194, 0
    %v221 = vsel %vm204, %v195, 0
    %v224 = vsel %vm204, %v196, 0
    %v227 = vsel %vm204, %v197, 0
    %229 = vmatpush.msra.mxu0 0.0
    %230 = vmatpush.msra.mxu0 0.0
    %231 = vmatpush.msra.mxu0 0.0
    %232 = vmatpush.msra.mxu0 0.0
    %233 = vmatpush.msra.mxu0 0.0
    %234 = vmatpush.msra.mxu0 0.0
    %235 = vmatpush.msra.mxu0 0.0
    %236 = vmatpush.msra.mxu0 0.0
    %237 = vmatpush.msra.mxu0 0.0
    %238 = vmatpush.msra.mxu0 0.0
    %239 = vmatpush.msra.mxu0 0.0
    %240 = vmatpush.msra.mxu0 0.0
    %241 = vmatpush.msra.mxu0 0.0
    %242 = vmatpush.msra.mxu0 0.0
    %243 = vmatpush.msra.mxu0 0.0
    %244 = vmatpush.msra.mxu0 %v206
    %245 = vmatmul.f32.gmra.mxu0 %v202
    %v246 = vpop.f32.mrf.mxu0
    %v247 = vadd.f32 0.0, %v246
    %248 = vdwg.mxu0
    %249 = vmatpush.msra.mxu0 0.0
    %250 = vmatpush.msra.mxu0 0.0
    %251 = vmatpush.msra.mxu0 0.0
    %252 = vmatpush.msra.mxu0 0.0
    %253 = vmatpush.msra.mxu0 0.0
    %254 = vmatpush.msra.mxu0 0.0
    %255 = vmatpush.msra.mxu0 0.0
    %256 = vmatpush.msra.mxu0 0.0
    %257 = vmatpush.msra.mxu0 0.0
    %258 = vmatpush.msra.mxu0 0.0
    %259 = vmatpush.msra.mxu0 0.0
    %260 = vmatpush.msra.mxu0 0.0
    %261 = vmatpush.msra.mxu0 0.0
    %262 = vmatpush.msra.mxu0 0.0
    %263 = vmatpush.msra.mxu0 0.0
    %264 = vmatpush.msra.mxu0 %v209
    %265 = vmatmul.f32.gmra.mxu0 %v202
    %v266 = vpop.f32.mrf.mxu0
    %v267 = vadd.f32 0.0, %v266
    %268 = vdwg.mxu0
    %269 = vmatpush.msra.mxu0 0.0
    %270 = vmatpush.msra.mxu0 0.0
    %271 = vmatpush.msra.mxu0 0.0
    %272 = vmatpush.msra.mxu0 0.0
    %273 = vmatpush.msra.mxu0 0.0
    %274 = vmatpush.msra.mxu0 0.0
    %275 = vmatpush.msra.mxu0 0.0
    %276 = vmatpush.msra.mxu0 0.0
    %277 = vmatpush.msra.mxu0 0.0
    %278 = vmatpush.msra.mxu0 0.0
    %279 = vmatpush.msra.mxu0 0.0
    %280 = vmatpush.msra.mxu0 0.0
    %281 = vmatpush.msra.mxu0 0.0
    %282 = vmatpush.msra.mxu0 0.0
    %283 = vmatpush.msra.mxu0 0.0
    %284 = vmatpush.msra.mxu0 %v212
    %285 = vmatmul.f32.gmra.mxu0 %v202
    %v286 = vpop.f32.mrf.mxu0
    %v287 = vadd.f32 0.0, %v286
    %288 = vdwg.mxu0
    %289 = vmatpush.msra.mxu0 0.0
    %290 = vmatpush.msra.mxu0 0.0
    %291 = vmatpush.msra.mxu0 0.0
    %292 = vmatpush.msra.mxu0 0.0
    %293 = vmatpush.msra.mxu0 0.0
    %294 = vmatpush.msra.mxu0 0.0
    %295 = vmatpush.msra.mxu0 0.0
    %296 = vmatpush.msra.mxu0 0.0
    %297 = vmatpush.msra.mxu0 0.0
    %298 = vmatpush.msra.mxu0 0.0
    %299 = vmatpush.msra.mxu0 0.0
    %300 = vmatpush.msra.mxu0 0.0
    %301 = vmatpush.msra.mxu0 0.0
    %302 = vmatpush.msra.mxu0 0.0
    %303 = vmatpush.msra.mxu0 0.0
    %304 = vmatpush.msra.mxu0 %v215
    %305 = vmatmul.f32.gmra.mxu0 %v202
    %v306 = vpop.f32.mrf.mxu0
    %v307 = vadd.f32 0.0, %v306
    %308 = vdwg.mxu0
    %309 = vmatpush.msra.mxu0 0.0
    %310 = vmatpush.msra.mxu0 0.0
    %311 = vmatpush.msra.mxu0 0.0
    %312 = vmatpush.msra.mxu0 0.0
    %313 = vmatpush.msra.mxu0 0.0
    %314 = vmatpush.msra.mxu0 0.0
    %315 = vmatpush.msra.mxu0 0.0
    %316 = vmatpush.msra.mxu0 0.0
    %317 = vmatpush.msra.mxu0 0.0
    %318 = vmatpush.msra.mxu0 0.0
    %319 = vmatpush.msra.mxu0 0.0
    %320 = vmatpush.msra.mxu0 0.0
    %321 = vmatpush.msra.mxu0 0.0
    %322 = vmatpush.msra.mxu0 0.0
    %323 = vmatpush.msra.mxu0 0.0
    %324 = vmatpush.msra.mxu0 %v218
    %325 = vmatmul.f32.gmra.mxu0 %v202
    %v326 = vpop.f32.mrf.mxu0
    %v327 = vadd.f32 0.0, %v326
    %328 = vdwg.mxu0
    %329 = vmatpush.msra.mxu0 0.0
    %330 = vmatpush.msra.mxu0 0.0
    %331 = vmatpush.msra.mxu0 0.0
    %332 = vmatpush.msra.mxu0 0.0
    %333 = vmatpush.msra.mxu0 0.0
    %334 = vmatpush.msra.mxu0 0.0
    %335 = vmatpush.msra.mxu0 0.0
    %336 = vmatpush.msra.mxu0 0.0
    %337 = vmatpush.msra.mxu0 0.0
    %338 = vmatpush.msra.mxu0 0.0
    %339 = vmatpush.msra.mxu0 0.0
    %340 = vmatpush.msra.mxu0 0.0
    %341 = vmatpush.msra.mxu0 0.0
    %342 = vmatpush.msra.mxu0 0.0
    %343 = vmatpush.msra.mxu0 0.0
    %344 = vmatpush.msra.mxu0 %v221
    %345 = vmatmul.f32.gmra.mxu0 %v202
    %v346 = vpop.f32.mrf.mxu0
    %v347 = vadd.f32 0.0, %v346
    %348 = vdwg.mxu0
    %349 = vmatpush.msra.mxu0 0.0
    %350 = vmatpush.msra.mxu0 0.0
    %351 = vmatpush.msra.mxu0 0.0
    %352 = vmatpush.msra.mxu0 0.0
    %353 = vmatpush.msra.mxu0 0.0
    %354 = vmatpush.msra.mxu0 0.0
    %355 = vmatpush.msra.mxu0 0.0
    %356 = vmatpush.msra.mxu0 0.0
    %357 = vmatpush.msra.mxu0 0.0
    %358 = vmatpush.msra.mxu0 0.0
    %359 = vmatpush.msra.mxu0 0.0
    %360 = vmatpush.msra.mxu0 0.0
    %361 = vmatpush.msra.mxu0 0.0
    %362 = vmatpush.msra.mxu0 0.0
    %363 = vmatpush.msra.mxu0 0.0
    %364 = vmatpush.msra.mxu0 %v224
    %365 = vmatmul.f32.gmra.mxu0 %v202
    %v366 = vpop.f32.mrf.mxu0
    %v367 = vadd.f32 0.0, %v366
    %368 = vdwg.mxu0
    %369 = vmatpush.msra.mxu0 0.0
    %370 = vmatpush.msra.mxu0 0.0
    %371 = vmatpush.msra.mxu0 0.0
    %372 = vmatpush.msra.mxu0 0.0
    %373 = vmatpush.msra.mxu0 0.0
    %374 = vmatpush.msra.mxu0 0.0
    %375 = vmatpush.msra.mxu0 0.0
    %376 = vmatpush.msra.mxu0 0.0
    %377 = vmatpush.msra.mxu0 0.0
    %378 = vmatpush.msra.mxu0 0.0
    %379 = vmatpush.msra.mxu0 0.0
    %380 = vmatpush.msra.mxu0 0.0
    %381 = vmatpush.msra.mxu0 0.0
    %382 = vmatpush.msra.mxu0 0.0
    %383 = vmatpush.msra.mxu0 0.0
    %384 = vmatpush.msra.mxu0 %v227
    %385 = vmatmul.f32.gmra.mxu0 %v202
    %v386 = vpop.f32.mrf.mxu0
    %v387 = vadd.f32 0.0, %v386
    %388 = vdwg.mxu0
    %v390 = vsel %vm200, %v120, 0
    %v393 = vsel %vm204, %v112, 0
    %v396 = vsel %vm204, %v113, 0
    %v399 = vsel %vm204, %v114, 0
    %v402 = vsel %vm204, %v115, 0
    %v405 = vsel %vm204, %v116, 0
    %v408 = vsel %vm204, %v117, 0
    %v411 = vsel %vm204, %v118, 0
    %v414 = vsel %vm204, %v119, 0
    %416 = vmatpush.msra.mxu0 0.0
    %417 = vmatpush.msra.mxu0 0.0
    %418 = vmatpush.msra.mxu0 0.0
    %419 = vmatpush.msra.mxu0 0.0
    %420 = vmatpush.msra.mxu0 0.0
    %421 = vmatpush.msra.mxu0 0.0
    %422 = vmatpush.msra.mxu0 0.0
    %423 = vmatpush.msra.mxu0 0.0
    %424 = vmatpush.msra.mxu0 0.0
    %425 = vmatpush.msra.mxu0 0.0
    %426 = vmatpush.msra.mxu0 0.0
    %427 = vmatpush.msra.mxu0 0.0
    %428 = vmatpush.msra.mxu0 0.0
    %429 = vmatpush.msra.mxu0 0.0
    %430 = vmatpush.msra.mxu0 0.0
    %431 = vmatpush.msra.mxu0 %v393
    %432 = vmatmul.f32.gmra.mxu0 %v390
    %v433 = vpop.f32.mrf.mxu0
    %v434 = vadd.f32 %v247, %v433
    %435 = vdwg.mxu0
    %436 = vmatpush.msra.mxu0 0.0
    %437 = vmatpush.msra.mxu0 0.0
    %438 = vmatpush.msra.mxu0 0.0
    %439 = vmatpush.msra.mxu0 0.0
    %440 = vmatpush.msra.mxu0 0.0
    %441 = vmatpush.msra.mxu0 0.0
    %442 = vmatpush.msra.mxu0 0.0
    %443 = vmatpush.msra.mxu0 0.0
    %444 = vmatpush.msra.mxu0 0.0
    %445 = vmatpush.msra.mxu0 0.0
    %446 = vmatpush.msra.mxu0 0.0
    %447 = vmatpush.msra.mxu0 0.0
    %448 = vmatpush.msra.mxu0 0.0
    %449 = vmatpush.msra.mxu0 0.0
    %450 = vmatpush.msra.mxu0 0.0
    %451 = vmatpush.msra.mxu0 %v396
    %452 = vmatmul.f32.gmra.mxu0 %v390
    %v453 = vpop.f32.mrf.mxu0
    %v454 = vadd.f32 %v267, %v453
    %455 = vdwg.mxu0
    %456 = vmatpush.msra.mxu0 0.0
    %457 = vmatpush.msra.mxu0 0.0
    %458 = vmatpush.msra.mxu0 0.0
    %459 = vmatpush.msra.mxu0 0.0
    %460 = vmatpush.msra.mxu0 0.0
    %461 = vmatpush.msra.mxu0 0.0
    %462 = vmatpush.msra.mxu0 0.0
    %463 = vmatpush.msra.mxu0 0.0
    %464 = vmatpush.msra.mxu0 0.0
    %465 = vmatpush.msra.mxu0 0.0
    %466 = vmatpush.msra.mxu0 0.0
    %467 = vmatpush.msra.mxu0 0.0
    %468 = vmatpush.msra.mxu0 0.0
    %469 = vmatpush.msra.mxu0 0.0
    %470 = vmatpush.msra.mxu0 0.0
    %471 = vmatpush.msra.mxu0 %v399
    %472 = vmatmul.f32.gmra.mxu0 %v390
    %v473 = vpop.f32.mrf.mxu0
    %v474 = vadd.f32 %v287, %v473
    %475 = vdwg.mxu0
    %476 = vmatpush.msra.mxu0 0.0
    %477 = vmatpush.msra.mxu0 0.0
    %478 = vmatpush.msra.mxu0 0.0
    %479 = vmatpush.msra.mxu0 0.0
    %480 = vmatpush.msra.mxu0 0.0
    %481 = vmatpush.msra.mxu0 0.0
    %482 = vmatpush.msra.mxu0 0.0
    %483 = vmatpush.msra.mxu0 0.0
    %484 = vmatpush.msra.mxu0 0.0
    %485 = vmatpush.msra.mxu0 0.0
    %486 = vmatpush.msra.mxu0 0.0
    %487 = vmatpush.msra.mxu0 0.0
    %488 = vmatpush.msra.mxu0 0.0
    %489 = vmatpush.msra.mxu0 0.0
    %490 = vmatpush.msra.mxu0 0.0
    %491 = vmatpush.msra.mxu0 %v402
    %492 = vmatmul.f32.gmra.mxu0 %v390
    %v493 = vpop.f32.mrf.mxu0
    %v494 = vadd.f32 %v307, %v493
    %495 = vdwg.mxu0
    %496 = vmatpush.msra.mxu0 0.0
    %497 = vmatpush.msra.mxu0 0.0
    %498 = vmatpush.msra.mxu0 0.0
    %499 = vmatpush.msra.mxu0 0.0
    %500 = vmatpush.msra.mxu0 0.0
    %501 = vmatpush.msra.mxu0 0.0
    %502 = vmatpush.msra.mxu0 0.0
    %503 = vmatpush.msra.mxu0 0.0
    %504 = vmatpush.msra.mxu0 0.0
    %505 = vmatpush.msra.mxu0 0.0
    %506 = vmatpush.msra.mxu0 0.0
    %507 = vmatpush.msra.mxu0 0.0
    %508 = vmatpush.msra.mxu0 0.0
    %509 = vmatpush.msra.mxu0 0.0
    %510 = vmatpush.msra.mxu0 0.0
    %511 = vmatpush.msra.mxu0 %v405
    %512 = vmatmul.f32.gmra.mxu0 %v390
    %v513 = vpop.f32.mrf.mxu0
    %v514 = vadd.f32 %v327, %v513
    %515 = vdwg.mxu0
    %516 = vmatpush.msra.mxu0 0.0
    %517 = vmatpush.msra.mxu0 0.0
    %518 = vmatpush.msra.mxu0 0.0
    %519 = vmatpush.msra.mxu0 0.0
    %520 = vmatpush.msra.mxu0 0.0
    %521 = vmatpush.msra.mxu0 0.0
    %522 = vmatpush.msra.mxu0 0.0
    %523 = vmatpush.msra.mxu0 0.0
    %524 = vmatpush.msra.mxu0 0.0
    %525 = vmatpush.msra.mxu0 0.0
    %526 = vmatpush.msra.mxu0 0.0
    %527 = vmatpush.msra.mxu0 0.0
    %528 = vmatpush.msra.mxu0 0.0
    %529 = vmatpush.msra.mxu0 0.0
    %530 = vmatpush.msra.mxu0 0.0
    %531 = vmatpush.msra.mxu0 %v408
    %532 = vmatmul.f32.gmra.mxu0 %v390
    %v533 = vpop.f32.mrf.mxu0
    %v534 = vadd.f32 %v347, %v533
    %535 = vdwg.mxu0
    %536 = vmatpush.msra.mxu0 0.0
    %537 = vmatpush.msra.mxu0 0.0
    %538 = vmatpush.msra.mxu0 0.0
    %539 = vmatpush.msra.mxu0 0.0
    %540 = vmatpush.msra.mxu0 0.0
    %541 = vmatpush.msra.mxu0 0.0
    %542 = vmatpush.msra.mxu0 0.0
    %543 = vmatpush.msra.mxu0 0.0
    %544 = vmatpush.msra.mxu0 0.0
    %545 = vmatpush.msra.mxu0 0.0
    %546 = vmatpush.msra.mxu0 0.0
    %547 = vmatpush.msra.mxu0 0.0
    %548 = vmatpush.msra.mxu0 0.0
    %549 = vmatpush.msra.mxu0 0.0
    %550 = vmatpush.msra.mxu0 0.0
    %551 = vmatpush.msra.mxu0 %v411
    %552 = vmatmul.f32.gmra.mxu0 %v390
    %v553 = vpop.f32.mrf.mxu0
    %v554 = vadd.f32 %v367, %v553
    %555 = vdwg.mxu0
    %556 = vmatpush.msra.mxu0 0.0
    %557 = vmatpush.msra.mxu0 0.0
    %558 = vmatpush.msra.mxu0 0.0
    %559 = vmatpush.msra.mxu0 0.0
    %560 = vmatpush.msra.mxu0 0.0
    %561 = vmatpush.msra.mxu0 0.0
    %562 = vmatpush.msra.mxu0 0.0
    %563 = vmatpush.msra.mxu0 0.0
    %564 = vmatpush.msra.mxu0 0.0
    %565 = vmatpush.msra.mxu0 0.0
    %566 = vmatpush.msra.mxu0 0.0
    %567 = vmatpush.msra.mxu0 0.0
    %568 = vmatpush.msra.mxu0 0.0
    %569 = vmatpush.msra.mxu0 0.0
    %570 = vmatpush.msra.mxu0 0.0
    %571 = vmatpush.msra.mxu0 %v414
    %572 = vmatmul.f32.gmra.mxu0 %v390
    %v573 = vpop.f32.mrf.mxu0
    %v574 = vadd.f32 %v387, %v573
    %575 = vdwg.mxu0
    %576 = vst [vmem:[#allocation1] ss:$2 sm:$0xff] %v34
    %s577 = scalar_lea.vmem [#allocation1], 16
    %578 = vst [vmem:[%s577] ss:$2 sm:$0xff] %v35
    %s579 = scalar_lea.vmem [#allocation1], 32
    %580 = vst [vmem:[%s579] ss:$2 sm:$0xff] %v36
    %s581 = scalar_lea.vmem [#allocation1], 48
    %582 = vst [vmem:[%s581] ss:$2 sm:$0xff] %v37
    %v583 = vld.sshfl [vmem:[#allocation1] sm:$0xff pattern:$0x75316420]
    %v584 = vld.sshfl [vmem:[#allocation1 + $0x8] sm:$0xff pattern:$0x75316420]
    %v585 = vld.sshfl [vmem:[#allocation1 + $0x10] sm:$0xff pattern:$0x75316420]
    %v586 = vld.sshfl [vmem:[#allocation1 + $0x18] sm:$0xff pattern:$0x75316420]
    %v587 = vld.sshfl [vmem:[#allocation1 + $0x20] sm:$0xff pattern:$0x75316420]
    %v588 = vld.sshfl [vmem:[#allocation1 + $0x28] sm:$0xff pattern:$0x75316420]
    %v589 = vld.sshfl [vmem:[#allocation1 + $0x30] sm:$0xff pattern:$0x75316420]
    %v590 = vld.sshfl [vmem:[#allocation1 + $0x38] sm:$0xff pattern:$0x75316420]
    %599 = vrot.lane.b32.xlu0 %v583, 15
    %v600 = vpop.permute.xlu0 %599
    %601 = vrot.lane.b32.xlu0 %v584, 15
    %v602 = vpop.permute.xlu0 %601
    %603 = vrot.lane.b32.xlu0 %v585, 15
    %v604 = vpop.permute.xlu0 %603
    %605 = vrot.lane.b32.xlu0 %v586, 15
    %v606 = vpop.permute.xlu0 %605
    %607 = vrot.lane.b32.xlu0 %v587, 15
    %v608 = vpop.permute.xlu0 %607
    %609 = vrot.lane.b32.xlu0 %v588, 15
    %v610 = vpop.permute.xlu0 %609
    %611 = vrot.lane.b32.xlu0 %v589, 15
    %v612 = vpop.permute.xlu0 %611
    %613 = vrot.lane.b32.xlu0 %v590, 15
    %v614 = vpop.permute.xlu0 %613
    %vm615 = vcmp.lt.s32.totalorder %v82, 15
    %v616 = vsel %vm615, %v612, %v614
    %v617 = vsel %vm615, %v610, %v612
    %v618 = vsel %vm615, %v608, %v610
    %v619 = vsel %vm615, %v606, %v608
    %v620 = vsel %vm615, %v604, %v606
    %v621 = vsel %vm615, %v602, %v604
    %v622 = vsel %vm615, %v600, %v602
    %v623 = vsel %vm615, %v614, %v600
    %s624 = scalar_lea.vmem [#allocation2], 2
    %v625 = vld [vmem:[%s624] ss:$8 sm:$0xf]
    %v626 = vld [vmem:[%s624] ss:$8 sm:$0xf0]
    %v627 = vor.u32 %v625, %v626
    %v629 = vperm.slane %v627, 0
    %v630 = vperm.slane %v627, 1
    %v631 = vperm.slane %v627, 2
    %v632 = vperm.slane %v627, 3
    %v633 = vperm.slane %v627, 4
    %v634 = vperm.slane %v627, 5
    %v635 = vperm.slane %v627, 6
    %v636 = vperm.slane %v627, 7
    %v645 = vmul.f32 %v623, %v629
    %v646 = vmul.f32 %v622, %v630
    %v647 = vmul.f32 %v621, %v631
    %v648 = vmul.f32 %v620, %v632
    %v649 = vmul.f32 %v619, %v633
    %v650 = vmul.f32 %v618, %v634
    %v651 = vmul.f32 %v617, %v635
    %v652 = vmul.f32 %v616, %v636
    %s653 = scalar_lea.vmem %s1, 16
    %v654 = vld [vmem:[%s653] sm:$0xff]
    %v656 = vsel %vm200, %v654, 0
    %v659 = vsel %vm204, %v645, 0
    %v662 = vsel %vm204, %v646, 0
    %v665 = vsel %vm204, %v647, 0
    %v668 = vsel %vm204, %v648, 0
    %v671 = vsel %vm204, %v649, 0
    %v674 = vsel %vm204, %v650, 0
    %v677 = vsel %vm204, %v651, 0
    %v680 = vsel %vm204, %v652, 0
    %682 = vmatpush.msra.mxu0 0.0
    %683 = vmatpush.msra.mxu0 0.0
    %684 = vmatpush.msra.mxu0 0.0
    %685 = vmatpush.msra.mxu0 0.0
    %686 = vmatpush.msra.mxu0 0.0
    %687 = vmatpush.msra.mxu0 0.0
    %688 = vmatpush.msra.mxu0 0.0
    %689 = vmatpush.msra.mxu0 0.0
    %690 = vmatpush.msra.mxu0 0.0
    %691 = vmatpush.msra.mxu0 0.0
    %692 = vmatpush.msra.mxu0 0.0
    %693 = vmatpush.msra.mxu0 0.0
    %694 = vmatpush.msra.mxu0 0.0
    %695 = vmatpush.msra.mxu0 0.0
    %696 = vmatpush.msra.mxu0 0.0
    %697 = vmatpush.msra.mxu0 %v659
    %698 = vmatmul.f32.gmra.mxu0 %v656
    %v699 = vpop.f32.mrf.mxu0
    %v700 = vadd.f32 0.0, %v699
    %701 = vdwg.mxu0
    %702 = vmatpush.msra.mxu0 0.0
    %703 = vmatpush.msra.mxu0 0.0
    %704 = vmatpush.msra.mxu0 0.0
    %705 = vmatpush.msra.mxu0 0.0
    %706 = vmatpush.msra.mxu0 0.0
    %707 = vmatpush.msra.mxu0 0.0
    %708 = vmatpush.msra.mxu0 0.0
    %709 = vmatpush.msra.mxu0 0.0
    %710 = vmatpush.msra.mxu0 0.0
    %711 = vmatpush.msra.mxu0 0.0
    %712 = vmatpush.msra.mxu0 0.0
    %713 = vmatpush.msra.mxu0 0.0
    %714 = vmatpush.msra.mxu0 0.0
    %715 = vmatpush.msra.mxu0 0.0
    %716 = vmatpush.msra.mxu0 0.0
    %717 = vmatpush.msra.mxu0 %v662
    %718 = vmatmul.f32.gmra.mxu0 %v656
    %v719 = vpop.f32.mrf.mxu0
    %v720 = vadd.f32 0.0, %v719
    %721 = vdwg.mxu0
    %722 = vmatpush.msra.mxu0 0.0
    %723 = vmatpush.msra.mxu0 0.0
    %724 = vmatpush.msra.mxu0 0.0
    %725 = vmatpush.msra.mxu0 0.0
    %726 = vmatpush.msra.mxu0 0.0
    %727 = vmatpush.msra.mxu0 0.0
    %728 = vmatpush.msra.mxu0 0.0
    %729 = vmatpush.msra.mxu0 0.0
    %730 = vmatpush.msra.mxu0 0.0
    %731 = vmatpush.msra.mxu0 0.0
    %732 = vmatpush.msra.mxu0 0.0
    %733 = vmatpush.msra.mxu0 0.0
    %734 = vmatpush.msra.mxu0 0.0
    %735 = vmatpush.msra.mxu0 0.0
    %736 = vmatpush.msra.mxu0 0.0
    %737 = vmatpush.msra.mxu0 %v665
    %738 = vmatmul.f32.gmra.mxu0 %v656
    %v739 = vpop.f32.mrf.mxu0
    %v740 = vadd.f32 0.0, %v739
    %741 = vdwg.mxu0
    %742 = vmatpush.msra.mxu0 0.0
    %743 = vmatpush.msra.mxu0 0.0
    %744 = vmatpush.msra.mxu0 0.0
    %745 = vmatpush.msra.mxu0 0.0
    %746 = vmatpush.msra.mxu0 0.0
    %747 = vmatpush.msra.mxu0 0.0
    %748 = vmatpush.msra.mxu0 0.0
    %749 = vmatpush.msra.mxu0 0.0
    %750 = vmatpush.msra.mxu0 0.0
    %751 = vmatpush.msra.mxu0 0.0
    %752 = vmatpush.msra.mxu0 0.0
    %753 = vmatpush.msra.mxu0 0.0
    %754 = vmatpush.msra.mxu0 0.0
    %755 = vmatpush.msra.mxu0 0.0
    %756 = vmatpush.msra.mxu0 0.0
    %757 = vmatpush.msra.mxu0 %v668
    %758 = vmatmul.f32.gmra.mxu0 %v656
    %v759 = vpop.f32.mrf.mxu0
    %v760 = vadd.f32 0.0, %v759
    %761 = vdwg.mxu0
    %762 = vmatpush.msra.mxu0 0.0
    %763 = vmatpush.msra.mxu0 0.0
    %764 = vmatpush.msra.mxu0 0.0
    %765 = vmatpush.msra.mxu0 0.0
    %766 = vmatpush.msra.mxu0 0.0
    %767 = vmatpush.msra.mxu0 0.0
    %768 = vmatpush.msra.mxu0 0.0
    %769 = vmatpush.msra.mxu0 0.0
    %770 = vmatpush.msra.mxu0 0.0
    %771 = vmatpush.msra.mxu0 0.0
    %772 = vmatpush.msra.mxu0 0.0
    %773 = vmatpush.msra.mxu0 0.0
    %774 = vmatpush.msra.mxu0 0.0
    %775 = vmatpush.msra.mxu0 0.0
    %776 = vmatpush.msra.mxu0 0.0
    %777 = vmatpush.msra.mxu0 %v671
    %778 = vmatmul.f32.gmra.mxu0 %v656
    %v779 = vpop.f32.mrf.mxu0
    %v780 = vadd.f32 0.0, %v779
    %781 = vdwg.mxu0
    %782 = vmatpush.msra.mxu0 0.0
    %783 = vmatpush.msra.mxu0 0.0
    %784 = vmatpush.msra.mxu0 0.0
    %785 = vmatpush.msra.mxu0 0.0
    %786 = vmatpush.msra.mxu0 0.0
    %787 = vmatpush.msra.mxu0 0.0
    %788 = vmatpush.msra.mxu0 0.0
    %789 = vmatpush.msra.mxu0 0.0
    %790 = vmatpush.msra.mxu0 0.0
    %791 = vmatpush.msra.mxu0 0.0
    %792 = vmatpush.msra.mxu0 0.0
    %793 = vmatpush.msra.mxu0 0.0
    %794 = vmatpush.msra.mxu0 0.0
    %795 = vmatpush.msra.mxu0 0.0
    %796 = vmatpush.msra.mxu0 0.0
    %797 = vmatpush.msra.mxu0 %v674
    %798 = vmatmul.f32.gmra.mxu0 %v656
    %v799 = vpop.f32.mrf.mxu0
    %v800 = vadd.f32 0.0, %v799
    %801 = vdwg.mxu0
    %802 = vmatpush.msra.mxu0 0.0
    %803 = vmatpush.msra.mxu0 0.0
    %804 = vmatpush.msra.mxu0 0.0
    %805 = vmatpush.msra.mxu0 0.0
    %806 = vmatpush.msra.mxu0 0.0
    %807 = vmatpush.msra.mxu0 0.0
    %808 = vmatpush.msra.mxu0 0.0
    %809 = vmatpush.msra.mxu0 0.0
    %810 = vmatpush.msra.mxu0 0.0
    %811 = vmatpush.msra.mxu0 0.0
    %812 = vmatpush.msra.mxu0 0.0
    %813 = vmatpush.msra.mxu0 0.0
    %814 = vmatpush.msra.mxu0 0.0
    %815 = vmatpush.msra.mxu0 0.0
    %816 = vmatpush.msra.mxu0 0.0
    %817 = vmatpush.msra.mxu0 %v677
    %818 = vmatmul.f32.gmra.mxu0 %v656
    %v819 = vpop.f32.mrf.mxu0
    %v820 = vadd.f32 0.0, %v819
    %821 = vdwg.mxu0
    %822 = vmatpush.msra.mxu0 0.0
    %823 = vmatpush.msra.mxu0 0.0
    %824 = vmatpush.msra.mxu0 0.0
    %825 = vmatpush.msra.mxu0 0.0
    %826 = vmatpush.msra.mxu0 0.0
    %827 = vmatpush.msra.mxu0 0.0
    %828 = vmatpush.msra.mxu0 0.0
    %829 = vmatpush.msra.mxu0 0.0
    %830 = vmatpush.msra.mxu0 0.0
    %831 = vmatpush.msra.mxu0 0.0
    %832 = vmatpush.msra.mxu0 0.0
    %833 = vmatpush.msra.mxu0 0.0
    %834 = vmatpush.msra.mxu0 0.0
    %835 = vmatpush.msra.mxu0 0.0
    %836 = vmatpush.msra.mxu0 0.0
    %837 = vmatpush.msra.mxu0 %v680
    %838 = vmatmul.f32.gmra.mxu0 %v656
    %v839 = vpop.f32.mrf.mxu0
    %v840 = vadd.f32 0.0, %v839
    %841 = vdwg.mxu0
    %v842 = vadd.f32 %v434, %v700
    %v843 = vadd.f32 %v454, %v720
    %v844 = vadd.f32 %v474, %v740
    %v845 = vadd.f32 %v494, %v760
    %v846 = vadd.f32 %v514, %v780
    %v847 = vadd.f32 %v534, %v800
    %v848 = vadd.f32 %v554, %v820
    %v849 = vadd.f32 %v574, %v840
    %850 = vst [vmem:[#allocation1] ss:$2 sm:$0xff] %v34
    %s851 = scalar_lea.vmem [#allocation1], 16
    %852 = vst [vmem:[%s851] ss:$2 sm:$0xff] %v35
    %s853 = scalar_lea.vmem [#allocation1], 32
    %854 = vst [vmem:[%s853] ss:$2 sm:$0xff] %v36
    %s855 = scalar_lea.vmem [#allocation1], 48
    %856 = vst [vmem:[%s855] ss:$2 sm:$0xff] %v37
    %v857 = vld.sshfl [vmem:[#allocation1] sm:$0xff pattern:$0x75316420]
    %v858 = vld.sshfl [vmem:[#allocation1 + $0x8] sm:$0xff pattern:$0x75316420]
    %v859 = vld.sshfl [vmem:[#allocation1 + $0x10] sm:$0xff pattern:$0x75316420]
    %v860 = vld.sshfl [vmem:[#allocation1 + $0x18] sm:$0xff pattern:$0x75316420]
    %v861 = vld.sshfl [vmem:[#allocation1 + $0x20] sm:$0xff pattern:$0x75316420]
    %v862 = vld.sshfl [vmem:[#allocation1 + $0x28] sm:$0xff pattern:$0x75316420]
    %v863 = vld.sshfl [vmem:[#allocation1 + $0x30] sm:$0xff pattern:$0x75316420]
    %v864 = vld.sshfl [vmem:[#allocation1 + $0x38] sm:$0xff pattern:$0x75316420]
    %873 = vrot.lane.b32.xlu0 %v857, 1
    %v874 = vpop.permute.xlu0 %873
    %875 = vrot.lane.b32.xlu0 %v858, 1
    %v876 = vpop.permute.xlu0 %875
    %877 = vrot.lane.b32.xlu0 %v859, 1
    %v878 = vpop.permute.xlu0 %877
    %879 = vrot.lane.b32.xlu0 %v860, 1
    %v880 = vpop.permute.xlu0 %879
    %881 = vrot.lane.b32.xlu0 %v861, 1
    %v882 = vpop.permute.xlu0 %881
    %883 = vrot.lane.b32.xlu0 %v862, 1
    %v884 = vpop.permute.xlu0 %883
    %885 = vrot.lane.b32.xlu0 %v863, 1
    %v886 = vpop.permute.xlu0 %885
    %887 = vrot.lane.b32.xlu0 %v864, 1
    %v888 = vpop.permute.xlu0 %887
    %vm889 = vcmp.lt.s32.totalorder %v82, 1
    %v890 = vsel %vm889, %v886, %v888
    %v891 = vsel %vm889, %v884, %v886
    %v892 = vsel %vm889, %v882, %v884
    %v893 = vsel %vm889, %v880, %v882
    %v894 = vsel %vm889, %v878, %v880
    %v895 = vsel %vm889, %v876, %v878
    %v896 = vsel %vm889, %v874, %v876
    %v897 = vsel %vm889, %v888, %v874
    %s898 = scalar_lea.vmem [#allocation2], 3
    %v899 = vld [vmem:[%s898] ss:$8 sm:$0xf]
    %v900 = vld [vmem:[%s898] ss:$8 sm:$0xf0]
    %v901 = vor.u32 %v899, %v900
    %v903 = vperm.slane %v901, 0
    %v904 = vperm.slane %v901, 1
    %v905 = vperm.slane %v901, 2
    %v906 = vperm.slane %v901, 3
    %v907 = vperm.slane %v901, 4
    %v908 = vperm.slane %v901, 5
    %v909 = vperm.slane %v901, 6
    %v910 = vperm.slane %v901, 7
    %v919 = vmul.f32 %v897, %v903
    %v920 = vmul.f32 %v896, %v904
    %v921 = vmul.f32 %v895, %v905
    %v922 = vmul.f32 %v894, %v906
    %v923 = vmul.f32 %v893, %v907
    %v924 = vmul.f32 %v892, %v908
    %v925 = vmul.f32 %v891, %v909
    %v926 = vmul.f32 %v890, %v910
    %s927 = scalar_lea.vmem %s1, 24
    %v928 = vld [vmem:[%s927] sm:$0xff]
    %v930 = vsel %vm200, %v928, 0
    %v933 = vsel %vm204, %v919, 0
    %v936 = vsel %vm204, %v920, 0
    %v939 = vsel %vm204, %v921, 0
    %v942 = vsel %vm204, %v922, 0
    %v945 = vsel %vm204, %v923, 0
    %v948 = vsel %vm204, %v924, 0
    %v951 = vsel %vm204, %v925, 0
    %v954 = vsel %vm204, %v926, 0
    %956 = vmatpush.msra.mxu0 0.0
    %957 = vmatpush.msra.mxu0 0.0
    %958 = vmatpush.msra.mxu0 0.0
    %959 = vmatpush.msra.mxu0 0.0
    %960 = vmatpush.msra.mxu0 0.0
    %961 = vmatpush.msra.mxu0 0.0
    %962 = vmatpush.msra.mxu0 0.0
    %963 = vmatpush.msra.mxu0 0.0
    %964 = vmatpush.msra.mxu0 0.0
    %965 = vmatpush.msra.mxu0 0.0
    %966 = vmatpush.msra.mxu0 0.0
    %967 = vmatpush.msra.mxu0 0.0
    %968 = vmatpush.msra.mxu0 0.0
    %969 = vmatpush.msra.mxu0 0.0
    %970 = vmatpush.msra.mxu0 0.0
    %971 = vmatpush.msra.mxu0 %v933
    %972 = vmatmul.f32.gmra.mxu0 %v930
    %v973 = vpop.f32.mrf.mxu0
    %v974 = vadd.f32 0.0, %v973
    %975 = vdwg.mxu0
    %976 = vmatpush.msra.mxu0 0.0
    %977 = vmatpush.msra.mxu0 0.0
    %978 = vmatpush.msra.mxu0 0.0
    %979 = vmatpush.msra.mxu0 0.0
    %980 = vmatpush.msra.mxu0 0.0
    %981 = vmatpush.msra.mxu0 0.0
    %982 = vmatpush.msra.mxu0 0.0
    %983 = vmatpush.msra.mxu0 0.0
    %984 = vmatpush.msra.mxu0 0.0
    %985 = vmatpush.msra.mxu0 0.0
    %986 = vmatpush.msra.mxu0 0.0
    %987 = vmatpush.msra.mxu0 0.0
    %988 = vmatpush.msra.mxu0 0.0
    %989 = vmatpush.msra.mxu0 0.0
    %990 = vmatpush.msra.mxu0 0.0
    %991 = vmatpush.msra.mxu0 %v936
    %992 = vmatmul.f32.gmra.mxu0 %v930
    %v993 = vpop.f32.mrf.mxu0
    %v994 = vadd.f32 0.0, %v993
    %995 = vdwg.mxu0
    %996 = vmatpush.msra.mxu0 0.0
    %997 = vmatpush.msra.mxu0 0.0
    %998 = vmatpush.msra.mxu0 0.0
    %999 = vmatpush.msra.mxu0 0.0
    %1000 = vmatpush.msra.mxu0 0.0
    %1001 = vmatpush.msra.mxu0 0.0
    %1002 = vmatpush.msra.mxu0 0.0
    %1003 = vmatpush.msra.mxu0 0.0
    %1004 = vmatpush.msra.mxu0 0.0
    %1005 = vmatpush.msra.mxu0 0.0
    %1006 = vmatpush.msra.mxu0 0.0
    %1007 = vmatpush.msra.mxu0 0.0
    %1008 = vmatpush.msra.mxu0 0.0
    %1009 = vmatpush.msra.mxu0 0.0
    %1010 = vmatpush.msra.mxu0 0.0
    %1011 = vmatpush.msra.mxu0 %v939
    %1012 = vmatmul.f32.gmra.mxu0 %v930
    %v1013 = vpop.f32.mrf.mxu0
    %v1014 = vadd.f32 0.0, %v1013
    %1015 = vdwg.mxu0
    %1016 = vmatpush.msra.mxu0 0.0
    %1017 = vmatpush.msra.mxu0 0.0
    %1018 = vmatpush.msra.mxu0 0.0
    %1019 = vmatpush.msra.mxu0 0.0
    %1020 = vmatpush.msra.mxu0 0.0
    %1021 = vmatpush.msra.mxu0 0.0
    %1022 = vmatpush.msra.mxu0 0.0
    %1023 = vmatpush.msra.mxu0 0.0
    %1024 = vmatpush.msra.mxu0 0.0
    %1025 = vmatpush.msra.mxu0 0.0
    %1026 = vmatpush.msra.mxu0 0.0
    %1027 = vmatpush.msra.mxu0 0.0
    %1028 = vmatpush.msra.mxu0 0.0
    %1029 = vmatpush.msra.mxu0 0.0
    %1030 = vmatpush.msra.mxu0 0.0
    %1031 = vmatpush.msra.mxu0 %v942
    %1032 = vmatmul.f32.gmra.mxu0 %v930
    %v1033 = vpop.f32.mrf.mxu0
    %v1034 = vadd.f32 0.0, %v1033
    %1035 = vdwg.mxu0
    %1036 = vmatpush.msra.mxu0 0.0
    %1037 = vmatpush.msra.mxu0 0.0
    %1038 = vmatpush.msra.mxu0 0.0
    %1039 = vmatpush.msra.mxu0 0.0
    %1040 = vmatpush.msra.mxu0 0.0
    %1041 = vmatpush.msra.mxu0 0.0
    %1042 = vmatpush.msra.mxu0 0.0
    %1043 = vmatpush.msra.mxu0 0.0
    %1044 = vmatpush.msra.mxu0 0.0
    %1045 = vmatpush.msra.mxu0 0.0
    %1046 = vmatpush.msra.mxu0 0.0
    %1047 = vmatpush.msra.mxu0 0.0
    %1048 = vmatpush.msra.mxu0 0.0
    %1049 = vmatpush.msra.mxu0 0.0
    %1050 = vmatpush.msra.mxu0 0.0
    %1051 = vmatpush.msra.mxu0 %v945
    %1052 = vmatmul.f32.gmra.mxu0 %v930
    %v1053 = vpop.f32.mrf.mxu0
    %v1054 = vadd.f32 0.0, %v1053
    %1055 = vdwg.mxu0
    %1056 = vmatpush.msra.mxu0 0.0
    %1057 = vmatpush.msra.mxu0 0.0
    %1058 = vmatpush.msra.mxu0 0.0
    %1059 = vmatpush.msra.mxu0 0.0
    %1060 = vmatpush.msra.mxu0 0.0
    %1061 = vmatpush.msra.mxu0 0.0
    %1062 = vmatpush.msra.mxu0 0.0
    %1063 = vmatpush.msra.mxu0 0.0
    %1064 = vmatpush.msra.mxu0 0.0
    %1065 = vmatpush.msra.mxu0 0.0
    %1066 = vmatpush.msra.mxu0 0.0
    %1067 = vmatpush.msra.mxu0 0.0
    %1068 = vmatpush.msra.mxu0 0.0
    %1069 = vmatpush.msra.mxu0 0.0
    %1070 = vmatpush.msra.mxu0 0.0
    %1071 = vmatpush.msra.mxu0 %v948
    %1072 = vmatmul.f32.gmra.mxu0 %v930
    %v1073 = vpop.f32.mrf.mxu0
    %v1074 = vadd.f32 0.0, %v1073
    %1075 = vdwg.mxu0
    %1076 = vmatpush.msra.mxu0 0.0
    %1077 = vmatpush.msra.mxu0 0.0
    %1078 = vmatpush.msra.mxu0 0.0
    %1079 = vmatpush.msra.mxu0 0.0
    %1080 = vmatpush.msra.mxu0 0.0
    %1081 = vmatpush.msra.mxu0 0.0
    %1082 = vmatpush.msra.mxu0 0.0
    %1083 = vmatpush.msra.mxu0 0.0
    %1084 = vmatpush.msra.mxu0 0.0
    %1085 = vmatpush.msra.mxu0 0.0
    %1086 = vmatpush.msra.mxu0 0.0
    %1087 = vmatpush.msra.mxu0 0.0
    %1088 = vmatpush.msra.mxu0 0.0
    %1089 = vmatpush.msra.mxu0 0.0
    %1090 = vmatpush.msra.mxu0 0.0
    %1091 = vmatpush.msra.mxu0 %v951
    %1092 = vmatmul.f32.gmra.mxu0 %v930
    %v1093 = vpop.f32.mrf.mxu0
    %v1094 = vadd.f32 0.0, %v1093
    %1095 = vdwg.mxu0
    %1096 = vmatpush.msra.mxu0 0.0
    %1097 = vmatpush.msra.mxu0 0.0
    %1098 = vmatpush.msra.mxu0 0.0
    %1099 = vmatpush.msra.mxu0 0.0
    %1100 = vmatpush.msra.mxu0 0.0
    %1101 = vmatpush.msra.mxu0 0.0
    %1102 = vmatpush.msra.mxu0 0.0
    %1103 = vmatpush.msra.mxu0 0.0
    %1104 = vmatpush.msra.mxu0 0.0
    %1105 = vmatpush.msra.mxu0 0.0
    %1106 = vmatpush.msra.mxu0 0.0
    %1107 = vmatpush.msra.mxu0 0.0
    %1108 = vmatpush.msra.mxu0 0.0
    %1109 = vmatpush.msra.mxu0 0.0
    %1110 = vmatpush.msra.mxu0 0.0
    %1111 = vmatpush.msra.mxu0 %v954
    %1112 = vmatmul.f32.gmra.mxu0 %v930
    %v1113 = vpop.f32.mrf.mxu0
    %v1114 = vadd.f32 0.0, %v1113
    %1115 = vdwg.mxu0
    %v1116 = vadd.f32 %v842, %v974
    %v1117 = vadd.f32 %v843, %v994
    %v1118 = vadd.f32 %v844, %v1014
    %v1119 = vadd.f32 %v845, %v1034
    %v1120 = vadd.f32 %v846, %v1054
    %v1121 = vadd.f32 %v847, %v1074
    %v1122 = vadd.f32 %v848, %v1094
    %v1123 = vadd.f32 %v849, %v1114
    %s1124 = scalar_lea.vmem %s1, 32
    %v1125 = vld [vmem:[%s1124] sm:$0xff]
    %1126 = vst [vmem:[#allocation1] ss:$2 sm:$0xff] %v34
    %s1127 = scalar_lea.vmem [#allocation1], 16
    %1128 = vst [vmem:[%s1127] ss:$2 sm:$0xff] %v35
    %s1129 = scalar_lea.vmem [#allocation1], 32
    %1130 = vst [vmem:[%s1129] ss:$2 sm:$0xff] %v36
    %s1131 = scalar_lea.vmem [#allocation1], 48
    %1132 = vst [vmem:[%s1131] ss:$2 sm:$0xff] %v37
    %v1133 = vld.sshfl [vmem:[#allocation1] sm:$0xff pattern:$0x75316420]
    %v1134 = vld.sshfl [vmem:[#allocation1 + $0x8] sm:$0xff pattern:$0x75316420]
    %v1135 = vld.sshfl [vmem:[#allocation1 + $0x10] sm:$0xff pattern:$0x75316420]
    %v1136 = vld.sshfl [vmem:[#allocation1 + $0x18] sm:$0xff pattern:$0x75316420]
    %v1137 = vld.sshfl [vmem:[#allocation1 + $0x20] sm:$0xff pattern:$0x75316420]
    %v1138 = vld.sshfl [vmem:[#allocation1 + $0x28] sm:$0xff pattern:$0x75316420]
    %v1139 = vld.sshfl [vmem:[#allocation1 + $0x30] sm:$0xff pattern:$0x75316420]
    %v1140 = vld.sshfl [vmem:[#allocation1 + $0x38] sm:$0xff pattern:$0x75316420]
    %v1142 = vsel %vm200, %v1125, 0
    %v1144 = vsel %vm204, %v1133, 0
    %v1146 = vsel %vm204, %v1134, 0
    %v1148 = vsel %vm204, %v1135, 0
    %v1150 = vsel %vm204, %v1136, 0
    %v1152 = vsel %vm204, %v1137, 0
    %v1154 = vsel %vm204, %v1138, 0
    %v1156 = vsel %vm204, %v1139, 0
    %v1158 = vsel %vm204, %v1140, 0
    %1160 = vmatpush.msra.mxu0 0.0
    %1161 = vmatpush.msra.mxu0 0.0
    %1162 = vmatpush.msra.mxu0 0.0
    %1163 = vmatpush.msra.mxu0 0.0
    %1164 = vmatpush.msra.mxu0 0.0
    %1165 = vmatpush.msra.mxu0 0.0
    %1166 = vmatpush.msra.mxu0 0.0
    %1167 = vmatpush.msra.mxu0 0.0
    %1168 = vmatpush.msra.mxu0 0.0
    %1169 = vmatpush.msra.mxu0 0.0
    %1170 = vmatpush.msra.mxu0 0.0
    %1171 = vmatpush.msra.mxu0 0.0
    %1172 = vmatpush.msra.mxu0 0.0
    %1173 = vmatpush.msra.mxu0 0.0
    %1174 = vmatpush.msra.mxu0 0.0
    %1175 = vmatpush.msra.mxu0 %v1144
    %1176 = vmatmul.f32.gmra.mxu0 %v1142
    %v1177 = vpop.f32.mrf.mxu0
    %v1178 = vadd.f32 0.0, %v1177
    %1179 = vdwg.mxu0
    %1180 = vmatpush.msra.mxu0 0.0
    %1181 = vmatpush.msra.mxu0 0.0
    %1182 = vmatpush.msra.mxu0 0.0
    %1183 = vmatpush.msra.mxu0 0.0
    %1184 = vmatpush.msra.mxu0 0.0
    %1185 = vmatpush.msra.mxu0 0.0
    %1186 = vmatpush.msra.mxu0 0.0
    %1187 = vmatpush.msra.mxu0 0.0
    %1188 = vmatpush.msra.mxu0 0.0
    %1189 = vmatpush.msra.mxu0 0.0
    %1190 = vmatpush.msra.mxu0 0.0
    %1191 = vmatpush.msra.mxu0 0.0
    %1192 = vmatpush.msra.mxu0 0.0
    %1193 = vmatpush.msra.mxu0 0.0
    %1194 = vmatpush.msra.mxu0 0.0
    %1195 = vmatpush.msra.mxu0 %v1146
    %1196 = vmatmul.f32.gmra.mxu0 %v1142
    %v1197 = vpop.f32.mrf.mxu0
    %v1198 = vadd.f32 0.0, %v1197
    %1199 = vdwg.mxu0
    %1200 = vmatpush.msra.mxu0 0.0
    %1201 = vmatpush.msra.mxu0 0.0
    %1202 = vmatpush.msra.mxu0 0.0
    %1203 = vmatpush.msra.mxu0 0.0
    %1204 = vmatpush.msra.mxu0 0.0
    %1205 = vmatpush.msra.mxu0 0.0
    %1206 = vmatpush.msra.mxu0 0.0
    %1207 = vmatpush.msra.mxu0 0.0
    %1208 = vmatpush.msra.mxu0 0.0
    %1209 = vmatpush.msra.mxu0 0.0
    %1210 = vmatpush.msra.mxu0 0.0
    %1211 = vmatpush.msra.mxu0 0.0
    %1212 = vmatpush.msra.mxu0 0.0
    %1213 = vmatpush.msra.mxu0 0.0
    %1214 = vmatpush.msra.mxu0 0.0
    %1215 = vmatpush.msra.mxu0 %v1148
    %1216 = vmatmul.f32.gmra.mxu0 %v1142
    %v1217 = vpop.f32.mrf.mxu0
    %v1218 = vadd.f32 0.0, %v1217
    %1219 = vdwg.mxu0
    %1220 = vmatpush.msra.mxu0 0.0
    %1221 = vmatpush.msra.mxu0 0.0
    %1222 = vmatpush.msra.mxu0 0.0
    %1223 = vmatpush.msra.mxu0 0.0
    %1224 = vmatpush.msra.mxu0 0.0
    %1225 = vmatpush.msra.mxu0 0.0
    %1226 = vmatpush.msra.mxu0 0.0
    %1227 = vmatpush.msra.mxu0 0.0
    %1228 = vmatpush.msra.mxu0 0.0
    %1229 = vmatpush.msra.mxu0 0.0
    %1230 = vmatpush.msra.mxu0 0.0
    %1231 = vmatpush.msra.mxu0 0.0
    %1232 = vmatpush.msra.mxu0 0.0
    %1233 = vmatpush.msra.mxu0 0.0
    %1234 = vmatpush.msra.mxu0 0.0
    %1235 = vmatpush.msra.mxu0 %v1150
    %1236 = vmatmul.f32.gmra.mxu0 %v1142
    %v1237 = vpop.f32.mrf.mxu0
    %v1238 = vadd.f32 0.0, %v1237
    %1239 = vdwg.mxu0
    %1240 = vmatpush.msra.mxu0 0.0
    %1241 = vmatpush.msra.mxu0 0.0
    %1242 = vmatpush.msra.mxu0 0.0
    %1243 = vmatpush.msra.mxu0 0.0
    %1244 = vmatpush.msra.mxu0 0.0
    %1245 = vmatpush.msra.mxu0 0.0
    %1246 = vmatpush.msra.mxu0 0.0
    %1247 = vmatpush.msra.mxu0 0.0
    %1248 = vmatpush.msra.mxu0 0.0
    %1249 = vmatpush.msra.mxu0 0.0
    %1250 = vmatpush.msra.mxu0 0.0
    %1251 = vmatpush.msra.mxu0 0.0
    %1252 = vmatpush.msra.mxu0 0.0
    %1253 = vmatpush.msra.mxu0 0.0
    %1254 = vmatpush.msra.mxu0 0.0
    %1255 = vmatpush.msra.mxu0 %v1152
    %1256 = vmatmul.f32.gmra.mxu0 %v1142
    %v1257 = vpop.f32.mrf.mxu0
    %v1258 = vadd.f32 0.0, %v1257
    %1259 = vdwg.mxu0
    %1260 = vmatpush.msra.mxu0 0.0
    %1261 = vmatpush.msra.mxu0 0.0
    %1262 = vmatpush.msra.mxu0 0.0
    %1263 = vmatpush.msra.mxu0 0.0
    %1264 = vmatpush.msra.mxu0 0.0
    %1265 = vmatpush.msra.mxu0 0.0
    %1266 = vmatpush.msra.mxu0 0.0
    %1267 = vmatpush.msra.mxu0 0.0
    %1268 = vmatpush.msra.mxu0 0.0
    %1269 = vmatpush.msra.mxu0 0.0
    %1270 = vmatpush.msra.mxu0 0.0
    %1271 = vmatpush.msra.mxu0 0.0
    %1272 = vmatpush.msra.mxu0 0.0
    %1273 = vmatpush.msra.mxu0 0.0
    %1274 = vmatpush.msra.mxu0 0.0
    %1275 = vmatpush.msra.mxu0 %v1154
    %1276 = vmatmul.f32.gmra.mxu0 %v1142
    %v1277 = vpop.f32.mrf.mxu0
    %v1278 = vadd.f32 0.0, %v1277
    %1279 = vdwg.mxu0
    %1280 = vmatpush.msra.mxu0 0.0
    %1281 = vmatpush.msra.mxu0 0.0
    %1282 = vmatpush.msra.mxu0 0.0
    %1283 = vmatpush.msra.mxu0 0.0
    %1284 = vmatpush.msra.mxu0 0.0
    %1285 = vmatpush.msra.mxu0 0.0
    %1286 = vmatpush.msra.mxu0 0.0
    %1287 = vmatpush.msra.mxu0 0.0
    %1288 = vmatpush.msra.mxu0 0.0
    %1289 = vmatpush.msra.mxu0 0.0
    %1290 = vmatpush.msra.mxu0 0.0
    %1291 = vmatpush.msra.mxu0 0.0
    %1292 = vmatpush.msra.mxu0 0.0
    %1293 = vmatpush.msra.mxu0 0.0
    %1294 = vmatpush.msra.mxu0 0.0
    %1295 = vmatpush.msra.mxu0 %v1156
    %1296 = vmatmul.f32.gmra.mxu0 %v1142
    %v1297 = vpop.f32.mrf.mxu0
    %v1298 = vadd.f32 0.0, %v1297
    %1299 = vdwg.mxu0
    %1300 = vmatpush.msra.mxu0 0.0
    %1301 = vmatpush.msra.mxu0 0.0
    %1302 = vmatpush.msra.mxu0 0.0
    %1303 = vmatpush.msra.mxu0 0.0
    %1304 = vmatpush.msra.mxu0 0.0
    %1305 = vmatpush.msra.mxu0 0.0
    %1306 = vmatpush.msra.mxu0 0.0
    %1307 = vmatpush.msra.mxu0 0.0
    %1308 = vmatpush.msra.mxu0 0.0
    %1309 = vmatpush.msra.mxu0 0.0
    %1310 = vmatpush.msra.mxu0 0.0
    %1311 = vmatpush.msra.mxu0 0.0
    %1312 = vmatpush.msra.mxu0 0.0
    %1313 = vmatpush.msra.mxu0 0.0
    %1314 = vmatpush.msra.mxu0 0.0
    %1315 = vmatpush.msra.mxu0 %v1158
    %1316 = vmatmul.f32.gmra.mxu0 %v1142
    %v1317 = vpop.f32.mrf.mxu0
    %v1318 = vadd.f32 0.0, %v1317
    %1319 = vdwg.mxu0
    %v1320 = vadd.f32 %v1116, %v1178
    %v1321 = vadd.f32 %v1117, %v1198
    %v1322 = vadd.f32 %v1118, %v1218
    %v1323 = vadd.f32 %v1119, %v1238
    %v1324 = vadd.f32 %v1120, %v1258
    %v1325 = vadd.f32 %v1121, %v1278
    %v1326 = vadd.f32 %v1122, %v1298
    %v1327 = vadd.f32 %v1123, %v1318
    %1328 = vst [vmem:[#allocation1] ss:$2 sm:$0xff] %v34
    %s1329 = scalar_lea.vmem [#allocation1], 16
    %1330 = vst [vmem:[%s1329] ss:$2 sm:$0xff] %v35
    %s1331 = scalar_lea.vmem [#allocation1], 32
    %1332 = vst [vmem:[%s1331] ss:$2 sm:$0xff] %v36
    %s1333 = scalar_lea.vmem [#allocation1], 48
    %1334 = vst [vmem:[%s1333] ss:$2 sm:$0xff] %v37
    %v1335 = vld.sshfl [vmem:[#allocation1] sm:$0xff pattern:$0x75316420]
    %v1336 = vld.sshfl [vmem:[#allocation1 + $0x8] sm:$0xff pattern:$0x75316420]
    %v1337 = vld.sshfl [vmem:[#allocation1 + $0x10] sm:$0xff pattern:$0x75316420]
    %v1338 = vld.sshfl [vmem:[#allocation1 + $0x18] sm:$0xff pattern:$0x75316420]
    %v1339 = vld.sshfl [vmem:[#allocation1 + $0x20] sm:$0xff pattern:$0x75316420]
    %v1340 = vld.sshfl [vmem:[#allocation1 + $0x28] sm:$0xff pattern:$0x75316420]
    %v1341 = vld.sshfl [vmem:[#allocation1 + $0x30] sm:$0xff pattern:$0x75316420]
    %v1342 = vld.sshfl [vmem:[#allocation1 + $0x38] sm:$0xff pattern:$0x75316420]
    %1351 = vrot.lane.b32.xlu0 %v1335, 127
    %v1352 = vpop.permute.xlu0 %1351
    %1353 = vrot.lane.b32.xlu0 %v1336, 127
    %v1354 = vpop.permute.xlu0 %1353
    %1355 = vrot.lane.b32.xlu0 %v1337, 127
    %v1356 = vpop.permute.xlu0 %1355
    %1357 = vrot.lane.b32.xlu0 %v1338, 127
    %v1358 = vpop.permute.xlu0 %1357
    %1359 = vrot.lane.b32.xlu0 %v1339, 127
    %v1360 = vpop.permute.xlu0 %1359
    %1361 = vrot.lane.b32.xlu0 %v1340, 127
    %v1362 = vpop.permute.xlu0 %1361
    %1363 = vrot.lane.b32.xlu0 %v1341, 127
    %v1364 = vpop.permute.xlu0 %1363
    %1365 = vrot.lane.b32.xlu0 %v1342, 127
    %v1366 = vpop.permute.xlu0 %1365
    %vm1367 = vcmp.lt.s32.totalorder %v82, 127
    %v1368 = vsel %vm1367, %v1364, %v1366
    %v1369 = vsel %vm1367, %v1362, %v1364
    %v1370 = vsel %vm1367, %v1360, %v1362
    %v1371 = vsel %vm1367, %v1358, %v1360
    %v1372 = vsel %vm1367, %v1356, %v1358
    %v1373 = vsel %vm1367, %v1354, %v1356
    %v1374 = vsel %vm1367, %v1352, %v1354
    %v1375 = vsel %vm1367, %v1366, %v1352
    %s1376 = scalar_lea.vmem [#allocation2], 5
    %v1377 = vld [vmem:[%s1376] ss:$8 sm:$0xf]
    %v1378 = vld [vmem:[%s1376] ss:$8 sm:$0xf0]
    %v1379 = vor.u32 %v1377, %v1378
    %v1381 = vperm.slane %v1379, 0
    %v1382 = vperm.slane %v1379, 1
    %v1383 = vperm.slane %v1379, 2
    %v1384 = vperm.slane %v1379, 3
    %v1385 = vperm.slane %v1379, 4
    %v1386 = vperm.slane %v1379, 5
    %v1387 = vperm.slane %v1379, 6
    %v1388 = vperm.slane %v1379, 7
    %v1397 = vmul.f32 %v1374, %v1381
    %v1398 = vmul.f32 %v1373, %v1382
    %v1399 = vmul.f32 %v1372, %v1383
    %v1400 = vmul.f32 %v1371, %v1384
    %v1401 = vmul.f32 %v1370, %v1385
    %v1402 = vmul.f32 %v1369, %v1386
    %v1403 = vmul.f32 %v1368, %v1387
    %v1404 = vmul.f32 %v1375, %v1388
    %s1405 = scalar_lea.vmem %s1, 40
    %v1406 = vld [vmem:[%s1405] sm:$0xff]
    %v1408 = vsel %vm200, %v1406, 0
    %v1411 = vsel %vm204, %v1397, 0
    %v1414 = vsel %vm204, %v1398, 0
    %v1417 = vsel %vm204, %v1399, 0
    %v1420 = vsel %vm204, %v1400, 0
    %v1423 = vsel %vm204, %v1401, 0
    %v1426 = vsel %vm204, %v1402, 0
    %v1429 = vsel %vm204, %v1403, 0
    %v1432 = vsel %vm204, %v1404, 0
    %1434 = vmatpush.msra.mxu0 0.0
    %1435 = vmatpush.msra.mxu0 0.0
    %1436 = vmatpush.msra.mxu0 0.0
    %1437 = vmatpush.msra.mxu0 0.0
    %1438 = vmatpush.msra.mxu0 0.0
    %1439 = vmatpush.msra.mxu0 0.0
    %1440 = vmatpush.msra.mxu0 0.0
    %1441 = vmatpush.msra.mxu0 0.0
    %1442 = vmatpush.msra.mxu0 0.0
    %1443 = vmatpush.msra.mxu0 0.0
    %1444 = vmatpush.msra.mxu0 0.0
    %1445 = vmatpush.msra.mxu0 0.0
    %1446 = vmatpush.msra.mxu0 0.0
    %1447 = vmatpush.msra.mxu0 0.0
    %1448 = vmatpush.msra.mxu0 0.0
    %1449 = vmatpush.msra.mxu0 %v1411
    %1450 = vmatmul.f32.gmra.mxu0 %v1408
    %v1451 = vpop.f32.mrf.mxu0
    %v1452 = vadd.f32 0.0, %v1451
    %1453 = vdwg.mxu0
    %1454 = vmatpush.msra.mxu0 0.0
    %1455 = vmatpush.msra.mxu0 0.0
    %1456 = vmatpush.msra.mxu0 0.0
    %1457 = vmatpush.msra.mxu0 0.0
    %1458 = vmatpush.msra.mxu0 0.0
    %1459 = vmatpush.msra.mxu0 0.0
    %1460 = vmatpush.msra.mxu0 0.0
    %1461 = vmatpush.msra.mxu0 0.0
    %1462 = vmatpush.msra.mxu0 0.0
    %1463 = vmatpush.msra.mxu0 0.0
    %1464 = vmatpush.msra.mxu0 0.0
    %1465 = vmatpush.msra.mxu0 0.0
    %1466 = vmatpush.msra.mxu0 0.0
    %1467 = vmatpush.msra.mxu0 0.0
    %1468 = vmatpush.msra.mxu0 0.0
    %1469 = vmatpush.msra.mxu0 %v1414
    %1470 = vmatmul.f32.gmra.mxu0 %v1408
    %v1471 = vpop.f32.mrf.mxu0
    %v1472 = vadd.f32 0.0, %v1471
    %1473 = vdwg.mxu0
    %1474 = vmatpush.msra.mxu0 0.0
    %1475 = vmatpush.msra.mxu0 0.0
    %1476 = vmatpush.msra.mxu0 0.0
    %1477 = vmatpush.msra.mxu0 0.0
    %1478 = vmatpush.msra.mxu0 0.0
    %1479 = vmatpush.msra.mxu0 0.0
    %1480 = vmatpush.msra.mxu0 0.0
    %1481 = vmatpush.msra.mxu0 0.0
    %1482 = vmatpush.msra.mxu0 0.0
    %1483 = vmatpush.msra.mxu0 0.0
    %1484 = vmatpush.msra.mxu0 0.0
    %1485 = vmatpush.msra.mxu0 0.0
    %1486 = vmatpush.msra.mxu0 0.0
    %1487 = vmatpush.msra.mxu0 0.0
    %1488 = vmatpush.msra.mxu0 0.0
    %1489 = vmatpush.msra.mxu0 %v1417
    %1490 = vmatmul.f32.gmra.mxu0 %v1408
    %v1491 = vpop.f32.mrf.mxu0
    %v1492 = vadd.f32 0.0, %v1491
    %1493 = vdwg.mxu0
    %1494 = vmatpush.msra.mxu0 0.0
    %1495 = vmatpush.msra.mxu0 0.0
    %1496 = vmatpush.msra.mxu0 0.0
    %1497 = vmatpush.msra.mxu0 0.0
    %1498 = vmatpush.msra.mxu0 0.0
    %1499 = vmatpush.msra.mxu0 0.0
    %1500 = vmatpush.msra.mxu0 0.0
    %1501 = vmatpush.msra.mxu0 0.0
    %1502 = vmatpush.msra.mxu0 0.0
    %1503 = vmatpush.msra.mxu0 0.0
    %1504 = vmatpush.msra.mxu0 0.0
    %1505 = vmatpush.msra.mxu0 0.0
    %1506 = vmatpush.msra.mxu0 0.0
    %1507 = vmatpush.msra.mxu0 0.0
    %1508 = vmatpush.msra.mxu0 0.0
    %1509 = vmatpush.msra.mxu0 %v1420
    %1510 = vmatmul.f32.gmra.mxu0 %v1408
    %v1511 = vpop.f32.mrf.mxu0
    %v1512 = vadd.f32 0.0, %v1511
    %1513 = vdwg.mxu0
    %1514 = vmatpush.msra.mxu0 0.0
    %1515 = vmatpush.msra.mxu0 0.0
    %1516 = vmatpush.msra.mxu0 0.0
    %1517 = vmatpush.msra.mxu0 0.0
    %1518 = vmatpush.msra.mxu0 0.0
    %1519 = vmatpush.msra.mxu0 0.0
    %1520 = vmatpush.msra.mxu0 0.0
    %1521 = vmatpush.msra.mxu0 0.0
    %1522 = vmatpush.msra.mxu0 0.0
    %1523 = vmatpush.msra.mxu0 0.0
    %1524 = vmatpush.msra.mxu0 0.0
    %1525 = vmatpush.msra.mxu0 0.0
    %1526 = vmatpush.msra.mxu0 0.0
    %1527 = vmatpush.msra.mxu0 0.0
    %1528 = vmatpush.msra.mxu0 0.0
    %1529 = vmatpush.msra.mxu0 %v1423
    %1530 = vmatmul.f32.gmra.mxu0 %v1408
    %v1531 = vpop.f32.mrf.mxu0
    %v1532 = vadd.f32 0.0, %v1531
    %1533 = vdwg.mxu0
    %1534 = vmatpush.msra.mxu0 0.0
    %1535 = vmatpush.msra.mxu0 0.0
    %1536 = vmatpush.msra.mxu0 0.0
    %1537 = vmatpush.msra.mxu0 0.0
    %1538 = vmatpush.msra.mxu0 0.0
    %1539 = vmatpush.msra.mxu0 0.0
    %1540 = vmatpush.msra.mxu0 0.0
    %1541 = vmatpush.msra.mxu0 0.0
    %1542 = vmatpush.msra.mxu0 0.0
    %1543 = vmatpush.msra.mxu0 0.0
    %1544 = vmatpush.msra.mxu0 0.0
    %1545 = vmatpush.msra.mxu0 0.0
    %1546 = vmatpush.msra.mxu0 0.0
    %1547 = vmatpush.msra.mxu0 0.0
    %1548 = vmatpush.msra.mxu0 0.0
    %1549 = vmatpush.msra.mxu0 %v1426
    %1550 = vmatmul.f32.gmra.mxu0 %v1408
    %v1551 = vpop.f32.mrf.mxu0
    %v1552 = vadd.f32 0.0, %v1551
    %1553 = vdwg.mxu0
    %1554 = vmatpush.msra.mxu0 0.0
    %1555 = vmatpush.msra.mxu0 0.0
    %1556 = vmatpush.msra.mxu0 0.0
    %1557 = vmatpush.msra.mxu0 0.0
    %1558 = vmatpush.msra.mxu0 0.0
    %1559 = vmatpush.msra.mxu0 0.0
    %1560 = vmatpush.msra.mxu0 0.0
    %1561 = vmatpush.msra.mxu0 0.0
    %1562 = vmatpush.msra.mxu0 0.0
    %1563 = vmatpush.msra.mxu0 0.0
    %1564 = vmatpush.msra.mxu0 0.0
    %1565 = vmatpush.msra.mxu0 0.0
    %1566 = vmatpush.msra.mxu0 0.0
    %1567 = vmatpush.msra.mxu0 0.0
    %1568 = vmatpush.msra.mxu0 0.0
    %1569 = vmatpush.msra.mxu0 %v1429
    %1570 = vmatmul.f32.gmra.mxu0 %v1408
    %v1571 = vpop.f32.mrf.mxu0
    %v1572 = vadd.f32 0.0, %v1571
    %1573 = vdwg.mxu0
    %1574 = vmatpush.msra.mxu0 0.0
    %1575 = vmatpush.msra.mxu0 0.0
    %1576 = vmatpush.msra.mxu0 0.0
    %1577 = vmatpush.msra.mxu0 0.0
    %1578 = vmatpush.msra.mxu0 0.0
    %1579 = vmatpush.msra.mxu0 0.0
    %1580 = vmatpush.msra.mxu0 0.0
    %1581 = vmatpush.msra.mxu0 0.0
    %1582 = vmatpush.msra.mxu0 0.0
    %1583 = vmatpush.msra.mxu0 0.0
    %1584 = vmatpush.msra.mxu0 0.0
    %1585 = vmatpush.msra.mxu0 0.0
    %1586 = vmatpush.msra.mxu0 0.0
    %1587 = vmatpush.msra.mxu0 0.0
    %1588 = vmatpush.msra.mxu0 0.0
    %1589 = vmatpush.msra.mxu0 %v1432
    %1590 = vmatmul.f32.gmra.mxu0 %v1408
    %v1591 = vpop.f32.mrf.mxu0
    %v1592 = vadd.f32 0.0, %v1591
    %1593 = vdwg.mxu0
    %v1594 = vadd.f32 %v1320, %v1452
    %v1595 = vadd.f32 %v1321, %v1472
    %v1596 = vadd.f32 %v1322, %v1492
    %v1597 = vadd.f32 %v1323, %v1512
    %v1598 = vadd.f32 %v1324, %v1532
    %v1599 = vadd.f32 %v1325, %v1552
    %v1600 = vadd.f32 %v1326, %v1572
    %v1601 = vadd.f32 %v1327, %v1592
    %1602 = vst [vmem:[#allocation1] ss:$2 sm:$0xff] %v34
    %s1603 = scalar_lea.vmem [#allocation1], 16
    %1604 = vst [vmem:[%s1603] ss:$2 sm:$0xff] %v35
    %s1605 = scalar_lea.vmem [#allocation1], 32
    %1606 = vst [vmem:[%s1605] ss:$2 sm:$0xff] %v36
    %s1607 = scalar_lea.vmem [#allocation1], 48
    %1608 = vst [vmem:[%s1607] ss:$2 sm:$0xff] %v37
    %v1609 = vld.sshfl [vmem:[#allocation1] sm:$0xff pattern:$0x75316420]
    %v1610 = vld.sshfl [vmem:[#allocation1 + $0x8] sm:$0xff pattern:$0x75316420]
    %v1611 = vld.sshfl [vmem:[#allocation1 + $0x10] sm:$0xff pattern:$0x75316420]
    %v1612 = vld.sshfl [vmem:[#allocation1 + $0x18] sm:$0xff pattern:$0x75316420]
    %v1613 = vld.sshfl [vmem:[#allocation1 + $0x20] sm:$0xff pattern:$0x75316420]
    %v1614 = vld.sshfl [vmem:[#allocation1 + $0x28] sm:$0xff pattern:$0x75316420]
    %v1615 = vld.sshfl [vmem:[#allocation1 + $0x30] sm:$0xff pattern:$0x75316420]
    %v1616 = vld.sshfl [vmem:[#allocation1 + $0x38] sm:$0xff pattern:$0x75316420]
    %1625 = vrot.lane.b32.xlu0 %v1609, 113
    %v1626 = vpop.permute.xlu0 %1625
    %1627 = vrot.lane.b32.xlu0 %v1610, 113
    %v1628 = vpop.permute.xlu0 %1627
    %1629 = vrot.lane.b32.xlu0 %v1611, 113
    %v1630 = vpop.permute.xlu0 %1629
    %1631 = vrot.lane.b32.xlu0 %v1612, 113
    %v1632 = vpop.permute.xlu0 %1631
    %1633 = vrot.lane.b32.xlu0 %v1613, 113
    %v1634 = vpop.permute.xlu0 %1633
    %1635 = vrot.lane.b32.xlu0 %v1614, 113
    %v1636 = vpop.permute.xlu0 %1635
    %1637 = vrot.lane.b32.xlu0 %v1615, 113
    %v1638 = vpop.permute.xlu0 %1637
    %1639 = vrot.lane.b32.xlu0 %v1616, 113
    %v1640 = vpop.permute.xlu0 %1639
    %vm1641 = vcmp.lt.s32.totalorder %v82, 113
    %v1642 = vsel %vm1641, %v1638, %v1640
    %v1643 = vsel %vm1641, %v1636, %v1638
    %v1644 = vsel %vm1641, %v1634, %v1636
    %v1645 = vsel %vm1641, %v1632, %v1634
    %v1646 = vsel %vm1641, %v1630, %v1632
    %v1647 = vsel %vm1641, %v1628, %v1630
    %v1648 = vsel %vm1641, %v1626, %v1628
    %v1649 = vsel %vm1641, %v1640, %v1626
    %s1650 = scalar_lea.vmem [#allocation2], 6
    %v1651 = vld [vmem:[%s1650] ss:$8 sm:$0xf]
    %v1652 = vld [vmem:[%s1650] ss:$8 sm:$0xf0]
    %v1653 = vor.u32 %v1651, %v1652
    %v1655 = vperm.slane %v1653, 0
    %v1656 = vperm.slane %v1653, 1
    %v1657 = vperm.slane %v1653, 2
    %v1658 = vperm.slane %v1653, 3
    %v1659 = vperm.slane %v1653, 4
    %v1660 = vperm.slane %v1653, 5
    %v1661 = vperm.slane %v1653, 6
    %v1662 = vperm.slane %v1653, 7
    %v1671 = vmul.f32 %v1648, %v1655
    %v1672 = vmul.f32 %v1647, %v1656
    %v1673 = vmul.f32 %v1646, %v1657
    %v1674 = vmul.f32 %v1645, %v1658
    %v1675 = vmul.f32 %v1644, %v1659
    %v1676 = vmul.f32 %v1643, %v1660
    %v1677 = vmul.f32 %v1642, %v1661
    %v1678 = vmul.f32 %v1649, %v1662
    %s1679 = scalar_lea.vmem %s1, 48
    %v1680 = vld [vmem:[%s1679] sm:$0xff]
    %v1682 = vsel %vm200, %v1680, 0
    %v1685 = vsel %vm204, %v1671, 0
    %v1688 = vsel %vm204, %v1672, 0
    %v1691 = vsel %vm204, %v1673, 0
    %v1694 = vsel %vm204, %v1674, 0
    %v1697 = vsel %vm204, %v1675, 0
    %v1700 = vsel %vm204, %v1676, 0
    %v1703 = vsel %vm204, %v1677, 0
    %v1706 = vsel %vm204, %v1678, 0
    %1708 = vmatpush.msra.mxu0 0.0
    %1709 = vmatpush.msra.mxu0 0.0
    %1710 = vmatpush.msra.mxu0 0.0
    %1711 = vmatpush.msra.mxu0 0.0
    %1712 = vmatpush.msra.mxu0 0.0
    %1713 = vmatpush.msra.mxu0 0.0
    %1714 = vmatpush.msra.mxu0 0.0
    %1715 = vmatpush.msra.mxu0 0.0
    %1716 = vmatpush.msra.mxu0 0.0
    %1717 = vmatpush.msra.mxu0 0.0
    %1718 = vmatpush.msra.mxu0 0.0
    %1719 = vmatpush.msra.mxu0 0.0
    %1720 = vmatpush.msra.mxu0 0.0
    %1721 = vmatpush.msra.mxu0 0.0
    %1722 = vmatpush.msra.mxu0 0.0
    %1723 = vmatpush.msra.mxu0 %v1685
    %1724 = vmatmul.f32.gmra.mxu0 %v1682
    %v1725 = vpop.f32.mrf.mxu0
    %v1726 = vadd.f32 0.0, %v1725
    %1727 = vdwg.mxu0
    %1728 = vmatpush.msra.mxu0 0.0
    %1729 = vmatpush.msra.mxu0 0.0
    %1730 = vmatpush.msra.mxu0 0.0
    %1731 = vmatpush.msra.mxu0 0.0
    %1732 = vmatpush.msra.mxu0 0.0
    %1733 = vmatpush.msra.mxu0 0.0
    %1734 = vmatpush.msra.mxu0 0.0
    %1735 = vmatpush.msra.mxu0 0.0
    %1736 = vmatpush.msra.mxu0 0.0
    %1737 = vmatpush.msra.mxu0 0.0
    %1738 = vmatpush.msra.mxu0 0.0
    %1739 = vmatpush.msra.mxu0 0.0
    %1740 = vmatpush.msra.mxu0 0.0
    %1741 = vmatpush.msra.mxu0 0.0
    %1742 = vmatpush.msra.mxu0 0.0
    %1743 = vmatpush.msra.mxu0 %v1688
    %1744 = vmatmul.f32.gmra.mxu0 %v1682
    %v1745 = vpop.f32.mrf.mxu0
    %v1746 = vadd.f32 0.0, %v1745
    %1747 = vdwg.mxu0
    %1748 = vmatpush.msra.mxu0 0.0
    %1749 = vmatpush.msra.mxu0 0.0
    %1750 = vmatpush.msra.mxu0 0.0
    %1751 = vmatpush.msra.mxu0 0.0
    %1752 = vmatpush.msra.mxu0 0.0
    %1753 = vmatpush.msra.mxu0 0.0
    %1754 = vmatpush.msra.mxu0 0.0
    %1755 = vmatpush.msra.mxu0 0.0
    %1756 = vmatpush.msra.mxu0 0.0
    %1757 = vmatpush.msra.mxu0 0.0
    %1758 = vmatpush.msra.mxu0 0.0
    %1759 = vmatpush.msra.mxu0 0.0
    %1760 = vmatpush.msra.mxu0 0.0
    %1761 = vmatpush.msra.mxu0 0.0
    %1762 = vmatpush.msra.mxu0 0.0
    %1763 = vmatpush.msra.mxu0 %v1691
    %1764 = vmatmul.f32.gmra.mxu0 %v1682
    %v1765 = vpop.f32.mrf.mxu0
    %v1766 = vadd.f32 0.0, %v1765
    %1767 = vdwg.mxu0
    %1768 = vmatpush.msra.mxu0 0.0
    %1769 = vmatpush.msra.mxu0 0.0
    %1770 = vmatpush.msra.mxu0 0.0
    %1771 = vmatpush.msra.mxu0 0.0
    %1772 = vmatpush.msra.mxu0 0.0
    %1773 = vmatpush.msra.mxu0 0.0
    %1774 = vmatpush.msra.mxu0 0.0
    %1775 = vmatpush.msra.mxu0 0.0
    %1776 = vmatpush.msra.mxu0 0.0
    %1777 = vmatpush.msra.mxu0 0.0
    %1778 = vmatpush.msra.mxu0 0.0
    %1779 = vmatpush.msra.mxu0 0.0
    %1780 = vmatpush.msra.mxu0 0.0
    %1781 = vmatpush.msra.mxu0 0.0
    %1782 = vmatpush.msra.mxu0 0.0
    %1783 = vmatpush.msra.mxu0 %v1694
    %1784 = vmatmul.f32.gmra.mxu0 %v1682
    %v1785 = vpop.f32.mrf.mxu0
    %v1786 = vadd.f32 0.0, %v1785
    %1787 = vdwg.mxu0
    %1788 = vmatpush.msra.mxu0 0.0
    %1789 = vmatpush.msra.mxu0 0.0
    %1790 = vmatpush.msra.mxu0 0.0
    %1791 = vmatpush.msra.mxu0 0.0
    %1792 = vmatpush.msra.mxu0 0.0
    %1793 = vmatpush.msra.mxu0 0.0
    %1794 = vmatpush.msra.mxu0 0.0
    %1795 = vmatpush.msra.mxu0 0.0
    %1796 = vmatpush.msra.mxu0 0.0
    %1797 = vmatpush.msra.mxu0 0.0
    %1798 = vmatpush.msra.mxu0 0.0
    %1799 = vmatpush.msra.mxu0 0.0
    %1800 = vmatpush.msra.mxu0 0.0
    %1801 = vmatpush.msra.mxu0 0.0
    %1802 = vmatpush.msra.mxu0 0.0
    %1803 = vmatpush.msra.mxu0 %v1697
    %1804 = vmatmul.f32.gmra.mxu0 %v1682
    %v1805 = vpop.f32.mrf.mxu0
    %v1806 = vadd.f32 0.0, %v1805
    %1807 = vdwg.mxu0
    %1808 = vmatpush.msra.mxu0 0.0
    %1809 = vmatpush.msra.mxu0 0.0
    %1810 = vmatpush.msra.mxu0 0.0
    %1811 = vmatpush.msra.mxu0 0.0
    %1812 = vmatpush.msra.mxu0 0.0
    %1813 = vmatpush.msra.mxu0 0.0
    %1814 = vmatpush.msra.mxu0 0.0
    %1815 = vmatpush.msra.mxu0 0.0
    %1816 = vmatpush.msra.mxu0 0.0
    %1817 = vmatpush.msra.mxu0 0.0
    %1818 = vmatpush.msra.mxu0 0.0
    %1819 = vmatpush.msra.mxu0 0.0
    %1820 = vmatpush.msra.mxu0 0.0
    %1821 = vmatpush.msra.mxu0 0.0
    %1822 = vmatpush.msra.mxu0 0.0
    %1823 = vmatpush.msra.mxu0 %v1700
    %1824 = vmatmul.f32.gmra.mxu0 %v1682
    %v1825 = vpop.f32.mrf.mxu0
    %v1826 = vadd.f32 0.0, %v1825
    %1827 = vdwg.mxu0
    %1828 = vmatpush.msra.mxu0 0.0
    %1829 = vmatpush.msra.mxu0 0.0
    %1830 = vmatpush.msra.mxu0 0.0
    %1831 = vmatpush.msra.mxu0 0.0
    %1832 = vmatpush.msra.mxu0 0.0
    %1833 = vmatpush.msra.mxu0 0.0
    %1834 = vmatpush.msra.mxu0 0.0
    %1835 = vmatpush.msra.mxu0 0.0
    %1836 = vmatpush.msra.mxu0 0.0
    %1837 = vmatpush.msra.mxu0 0.0
    %1838 = vmatpush.msra.mxu0 0.0
    %1839 = vmatpush.msra.mxu0 0.0
    %1840 = vmatpush.msra.mxu0 0.0
    %1841 = vmatpush.msra.mxu0 0.0
    %1842 = vmatpush.msra.mxu0 0.0
    %1843 = vmatpush.msra.mxu0 %v1703
    %1844 = vmatmul.f32.gmra.mxu0 %v1682
    %v1845 = vpop.f32.mrf.mxu0
    %v1846 = vadd.f32 0.0, %v1845
    %1847 = vdwg.mxu0
    %1848 = vmatpush.msra.mxu0 0.0
    %1849 = vmatpush.msra.mxu0 0.0
    %1850 = vmatpush.msra.mxu0 0.0
    %1851 = vmatpush.msra.mxu0 0.0
    %1852 = vmatpush.msra.mxu0 0.0
    %1853 = vmatpush.msra.mxu0 0.0
    %1854 = vmatpush.msra.mxu0 0.0
    %1855 = vmatpush.msra.mxu0 0.0
    %1856 = vmatpush.msra.mxu0 0.0
    %1857 = vmatpush.msra.mxu0 0.0
    %1858 = vmatpush.msra.mxu0 0.0
    %1859 = vmatpush.msra.mxu0 0.0
    %1860 = vmatpush.msra.mxu0 0.0
    %1861 = vmatpush.msra.mxu0 0.0
    %1862 = vmatpush.msra.mxu0 0.0
    %1863 = vmatpush.msra.mxu0 %v1706
    %1864 = vmatmul.f32.gmra.mxu0 %v1682
    %v1865 = vpop.f32.mrf.mxu0
    %v1866 = vadd.f32 0.0, %v1865
    %1867 = vdwg.mxu0
    %v1868 = vadd.f32 %v1594, %v1726
    %v1869 = vadd.f32 %v1595, %v1746
    %v1870 = vadd.f32 %v1596, %v1766
    %v1871 = vadd.f32 %v1597, %v1786
    %v1872 = vadd.f32 %v1598, %v1806
    %v1873 = vadd.f32 %v1599, %v1826
    %v1874 = vadd.f32 %v1600, %v1846
    %v1875 = vadd.f32 %v1601, %v1866
    %1876 = vst [vmem:[#allocation1] ss:$2 sm:$0xff] %v34
    %s1877 = scalar_lea.vmem [#allocation1], 16
    %1878 = vst [vmem:[%s1877] ss:$2 sm:$0xff] %v35
    %s1879 = scalar_lea.vmem [#allocation1], 32
    %1880 = vst [vmem:[%s1879] ss:$2 sm:$0xff] %v36
    %s1881 = scalar_lea.vmem [#allocation1], 48
    %1882 = vst [vmem:[%s1881] ss:$2 sm:$0xff] %v37
    %v1883 = vld.sshfl [vmem:[#allocation1] sm:$0xff pattern:$0x75316420]
    %v1884 = vld.sshfl [vmem:[#allocation1 + $0x8] sm:$0xff pattern:$0x75316420]
    %v1885 = vld.sshfl [vmem:[#allocation1 + $0x10] sm:$0xff pattern:$0x75316420]
    %v1886 = vld.sshfl [vmem:[#allocation1 + $0x18] sm:$0xff pattern:$0x75316420]
    %v1887 = vld.sshfl [vmem:[#allocation1 + $0x20] sm:$0xff pattern:$0x75316420]
    %v1888 = vld.sshfl [vmem:[#allocation1 + $0x28] sm:$0xff pattern:$0x75316420]
    %v1889 = vld.sshfl [vmem:[#allocation1 + $0x30] sm:$0xff pattern:$0x75316420]
    %v1890 = vld.sshfl [vmem:[#allocation1 + $0x38] sm:$0xff pattern:$0x75316420]
    %1899 = vrot.lane.b32.xlu0 %v1883, 112
    %v1900 = vpop.permute.xlu0 %1899
    %1901 = vrot.lane.b32.xlu0 %v1884, 112
    %v1902 = vpop.permute.xlu0 %1901
    %1903 = vrot.lane.b32.xlu0 %v1885, 112
    %v1904 = vpop.permute.xlu0 %1903
    %1905 = vrot.lane.b32.xlu0 %v1886, 112
    %v1906 = vpop.permute.xlu0 %1905
    %1907 = vrot.lane.b32.xlu0 %v1887, 112
    %v1908 = vpop.permute.xlu0 %1907
    %1909 = vrot.lane.b32.xlu0 %v1888, 112
    %v1910 = vpop.permute.xlu0 %1909
    %1911 = vrot.lane.b32.xlu0 %v1889, 112
    %v1912 = vpop.permute.xlu0 %1911
    %1913 = vrot.lane.b32.xlu0 %v1890, 112
    %v1914 = vpop.permute.xlu0 %1913
    %vm1915 = vcmp.lt.s32.totalorder %v82, 112
    %v1916 = vsel %vm1915, %v1912, %v1914
    %v1917 = vsel %vm1915, %v1910, %v1912
    %v1918 = vsel %vm1915, %v1908, %v1910
    %v1919 = vsel %vm1915, %v1906, %v1908
    %v1920 = vsel %vm1915, %v1904, %v1906
    %v1921 = vsel %vm1915, %v1902, %v1904
    %v1922 = vsel %vm1915, %v1900, %v1902
    %v1923 = vsel %vm1915, %v1914, %v1900
    %s1924 = scalar_lea.vmem [#allocation2], 7
    %v1925 = vld [vmem:[%s1924] ss:$8 sm:$0xf]
    %v1926 = vld [vmem:[%s1924] ss:$8 sm:$0xf0]
    %v1927 = vor.u32 %v1925, %v1926
    %v1929 = vperm.slane %v1927, 0
    %v1930 = vperm.slane %v1927, 1
    %v1931 = vperm.slane %v1927, 2
    %v1932 = vperm.slane %v1927, 3
    %v1933 = vperm.slane %v1927, 4
    %v1934 = vperm.slane %v1927, 5
    %v1935 = vperm.slane %v1927, 6
    %v1936 = vperm.slane %v1927, 7
    %v1945 = vmul.f32 %v1922, %v1929
    %v1946 = vmul.f32 %v1921, %v1930
    %v1947 = vmul.f32 %v1920, %v1931
    %v1948 = vmul.f32 %v1919, %v1932
    %v1949 = vmul.f32 %v1918, %v1933
    %v1950 = vmul.f32 %v1917, %v1934
    %v1951 = vmul.f32 %v1916, %v1935
    %v1952 = vmul.f32 %v1923, %v1936
    %s1953 = scalar_lea.vmem %s1, 56
    %v1954 = vld [vmem:[%s1953] sm:$0xff]
    %v1956 = vsel %vm200, %v1954, 0
    %v1959 = vsel %vm204, %v1945, 0
    %v1962 = vsel %vm204, %v1946, 0
    %v1965 = vsel %vm204, %v1947, 0
    %v1968 = vsel %vm204, %v1948, 0
    %v1971 = vsel %vm204, %v1949, 0
    %v1974 = vsel %vm204, %v1950, 0
    %v1977 = vsel %vm204, %v1951, 0
    %v1980 = vsel %vm204, %v1952, 0
    %1982 = vmatpush.msra.mxu0 0.0
    %1983 = vmatpush.msra.mxu0 0.0
    %1984 = vmatpush.msra.mxu0 0.0
    %1985 = vmatpush.msra.mxu0 0.0
    %1986 = vmatpush.msra.mxu0 0.0
    %1987 = vmatpush.msra.mxu0 0.0
    %1988 = vmatpush.msra.mxu0 0.0
    %1989 = vmatpush.msra.mxu0 0.0
    %1990 = vmatpush.msra.mxu0 0.0
    %1991 = vmatpush.msra.mxu0 0.0
    %1992 = vmatpush.msra.mxu0 0.0
    %1993 = vmatpush.msra.mxu0 0.0
    %1994 = vmatpush.msra.mxu0 0.0
    %1995 = vmatpush.msra.mxu0 0.0
    %1996 = vmatpush.msra.mxu0 0.0
    %1997 = vmatpush.msra.mxu0 %v1959
    %1998 = vmatmul.f32.gmra.mxu0 %v1956
    %v1999 = vpop.f32.mrf.mxu0
    %v2000 = vadd.f32 0.0, %v1999
    %2001 = vdwg.mxu0
    %2002 = vmatpush.msra.mxu0 0.0
    %2003 = vmatpush.msra.mxu0 0.0
    %2004 = vmatpush.msra.mxu0 0.0
    %2005 = vmatpush.msra.mxu0 0.0
    %2006 = vmatpush.msra.mxu0 0.0
    %2007 = vmatpush.msra.mxu0 0.0
    %2008 = vmatpush.msra.mxu0 0.0
    %2009 = vmatpush.msra.mxu0 0.0
    %2010 = vmatpush.msra.mxu0 0.0
    %2011 = vmatpush.msra.mxu0 0.0
    %2012 = vmatpush.msra.mxu0 0.0
    %2013 = vmatpush.msra.mxu0 0.0
    %2014 = vmatpush.msra.mxu0 0.0
    %2015 = vmatpush.msra.mxu0 0.0
    %2016 = vmatpush.msra.mxu0 0.0
    %2017 = vmatpush.msra.mxu0 %v1962
    %2018 = vmatmul.f32.gmra.mxu0 %v1956
    %v2019 = vpop.f32.mrf.mxu0
    %v2020 = vadd.f32 0.0, %v2019
    %2021 = vdwg.mxu0
    %2022 = vmatpush.msra.mxu0 0.0
    %2023 = vmatpush.msra.mxu0 0.0
    %2024 = vmatpush.msra.mxu0 0.0
    %2025 = vmatpush.msra.mxu0 0.0
    %2026 = vmatpush.msra.mxu0 0.0
    %2027 = vmatpush.msra.mxu0 0.0
    %2028 = vmatpush.msra.mxu0 0.0
    %2029 = vmatpush.msra.mxu0 0.0
    %2030 = vmatpush.msra.mxu0 0.0
    %2031 = vmatpush.msra.mxu0 0.0
    %2032 = vmatpush.msra.mxu0 0.0
    %2033 = vmatpush.msra.mxu0 0.0
    %2034 = vmatpush.msra.mxu0 0.0
    %2035 = vmatpush.msra.mxu0 0.0
    %2036 = vmatpush.msra.mxu0 0.0
    %2037 = vmatpush.msra.mxu0 %v1965
    %2038 = vmatmul.f32.gmra.mxu0 %v1956
    %v2039 = vpop.f32.mrf.mxu0
    %v2040 = vadd.f32 0.0, %v2039
    %2041 = vdwg.mxu0
    %2042 = vmatpush.msra.mxu0 0.0
    %2043 = vmatpush.msra.mxu0 0.0
    %2044 = vmatpush.msra.mxu0 0.0
    %2045 = vmatpush.msra.mxu0 0.0
    %2046 = vmatpush.msra.mxu0 0.0
    %2047 = vmatpush.msra.mxu0 0.0
    %2048 = vmatpush.msra.mxu0 0.0
    %2049 = vmatpush.msra.mxu0 0.0
    %2050 = vmatpush.msra.mxu0 0.0
    %2051 = vmatpush.msra.mxu0 0.0
    %2052 = vmatpush.msra.mxu0 0.0
    %2053 = vmatpush.msra.mxu0 0.0
    %2054 = vmatpush.msra.mxu0 0.0
    %2055 = vmatpush.msra.mxu0 0.0
    %2056 = vmatpush.msra.mxu0 0.0
    %2057 = vmatpush.msra.mxu0 %v1968
    %2058 = vmatmul.f32.gmra.mxu0 %v1956
    %v2059 = vpop.f32.mrf.mxu0
    %v2060 = vadd.f32 0.0, %v2059
    %2061 = vdwg.mxu0
    %2062 = vmatpush.msra.mxu0 0.0
    %2063 = vmatpush.msra.mxu0 0.0
    %2064 = vmatpush.msra.mxu0 0.0
    %2065 = vmatpush.msra.mxu0 0.0
    %2066 = vmatpush.msra.mxu0 0.0
    %2067 = vmatpush.msra.mxu0 0.0
    %2068 = vmatpush.msra.mxu0 0.0
    %2069 = vmatpush.msra.mxu0 0.0
    %2070 = vmatpush.msra.mxu0 0.0
    %2071 = vmatpush.msra.mxu0 0.0
    %2072 = vmatpush.msra.mxu0 0.0
    %2073 = vmatpush.msra.mxu0 0.0
    %2074 = vmatpush.msra.mxu0 0.0
    %2075 = vmatpush.msra.mxu0 0.0
    %2076 = vmatpush.msra.mxu0 0.0
    %2077 = vmatpush.msra.mxu0 %v1971
    %2078 = vmatmul.f32.gmra.mxu0 %v1956
    %v2079 = vpop.f32.mrf.mxu0
    %v2080 = vadd.f32 0.0, %v2079
    %2081 = vdwg.mxu0
    %2082 = vmatpush.msra.mxu0 0.0
    %2083 = vmatpush.msra.mxu0 0.0
    %2084 = vmatpush.msra.mxu0 0.0
    %2085 = vmatpush.msra.mxu0 0.0
    %2086 = vmatpush.msra.mxu0 0.0
    %2087 = vmatpush.msra.mxu0 0.0
    %2088 = vmatpush.msra.mxu0 0.0
    %2089 = vmatpush.msra.mxu0 0.0
    %2090 = vmatpush.msra.mxu0 0.0
    %2091 = vmatpush.msra.mxu0 0.0
    %2092 = vmatpush.msra.mxu0 0.0
    %2093 = vmatpush.msra.mxu0 0.0
    %2094 = vmatpush.msra.mxu0 0.0
    %2095 = vmatpush.msra.mxu0 0.0
    %2096 = vmatpush.msra.mxu0 0.0
    %2097 = vmatpush.msra.mxu0 %v1974
    %2098 = vmatmul.f32.gmra.mxu0 %v1956
    %v2099 = vpop.f32.mrf.mxu0
    %v2100 = vadd.f32 0.0, %v2099
    %2101 = vdwg.mxu0
    %2102 = vmatpush.msra.mxu0 0.0
    %2103 = vmatpush.msra.mxu0 0.0
    %2104 = vmatpush.msra.mxu0 0.0
    %2105 = vmatpush.msra.mxu0 0.0
    %2106 = vmatpush.msra.mxu0 0.0
    %2107 = vmatpush.msra.mxu0 0.0
    %2108 = vmatpush.msra.mxu0 0.0
    %2109 = vmatpush.msra.mxu0 0.0
    %2110 = vmatpush.msra.mxu0 0.0
    %2111 = vmatpush.msra.mxu0 0.0
    %2112 = vmatpush.msra.mxu0 0.0
    %2113 = vmatpush.msra.mxu0 0.0
    %2114 = vmatpush.msra.mxu0 0.0
    %2115 = vmatpush.msra.mxu0 0.0
    %2116 = vmatpush.msra.mxu0 0.0
    %2117 = vmatpush.msra.mxu0 %v1977
    %2118 = vmatmul.f32.gmra.mxu0 %v1956
    %v2119 = vpop.f32.mrf.mxu0
    %v2120 = vadd.f32 0.0, %v2119
    %2121 = vdwg.mxu0
    %2122 = vmatpush.msra.mxu0 0.0
    %2123 = vmatpush.msra.mxu0 0.0
    %2124 = vmatpush.msra.mxu0 0.0
    %2125 = vmatpush.msra.mxu0 0.0
    %2126 = vmatpush.msra.mxu0 0.0
    %2127 = vmatpush.msra.mxu0 0.0
    %2128 = vmatpush.msra.mxu0 0.0
    %2129 = vmatpush.msra.mxu0 0.0
    %2130 = vmatpush.msra.mxu0 0.0
    %2131 = vmatpush.msra.mxu0 0.0
    %2132 = vmatpush.msra.mxu0 0.0
    %2133 = vmatpush.msra.mxu0 0.0
    %2134 = vmatpush.msra.mxu0 0.0
    %2135 = vmatpush.msra.mxu0 0.0
    %2136 = vmatpush.msra.mxu0 0.0
    %2137 = vmatpush.msra.mxu0 %v1980
    %2138 = vmatmul.f32.gmra.mxu0 %v1956
    %v2139 = vpop.f32.mrf.mxu0
    %v2140 = vadd.f32 0.0, %v2139
    %2141 = vdwg.mxu0
    %v2142 = vadd.f32 %v1868, %v2000
    %v2143 = vadd.f32 %v1869, %v2020
    %v2144 = vadd.f32 %v1870, %v2040
    %v2145 = vadd.f32 %v1871, %v2060
    %v2146 = vadd.f32 %v1872, %v2080
    %v2147 = vadd.f32 %v1873, %v2100
    %v2148 = vadd.f32 %v1874, %v2120
    %v2149 = vadd.f32 %v1875, %v2140
    %2150 = vst [vmem:[#allocation1] ss:$2 sm:$0xff] %v34
    %s2151 = scalar_lea.vmem [#allocation1], 16
    %2152 = vst [vmem:[%s2151] ss:$2 sm:$0xff] %v35
    %s2153 = scalar_lea.vmem [#allocation1], 32
    %2154 = vst [vmem:[%s2153] ss:$2 sm:$0xff] %v36
    %s2155 = scalar_lea.vmem [#allocation1], 48
    %2156 = vst [vmem:[%s2155] ss:$2 sm:$0xff] %v37
    %v2157 = vld.sshfl [vmem:[#allocation1] sm:$0xff pattern:$0x75316420]
    %v2158 = vld.sshfl [vmem:[#allocation1 + $0x8] sm:$0xff pattern:$0x75316420]
    %v2159 = vld.sshfl [vmem:[#allocation1 + $0x10] sm:$0xff pattern:$0x75316420]
    %v2160 = vld.sshfl [vmem:[#allocation1 + $0x18] sm:$0xff pattern:$0x75316420]
    %v2161 = vld.sshfl [vmem:[#allocation1 + $0x20] sm:$0xff pattern:$0x75316420]
    %v2162 = vld.sshfl [vmem:[#allocation1 + $0x28] sm:$0xff pattern:$0x75316420]
    %v2163 = vld.sshfl [vmem:[#allocation1 + $0x30] sm:$0xff pattern:$0x75316420]
    %v2164 = vld.sshfl [vmem:[#allocation1 + $0x38] sm:$0xff pattern:$0x75316420]
    %2173 = vrot.lane.b32.xlu0 %v2157, 111
    %v2174 = vpop.permute.xlu0 %2173
    %2175 = vrot.lane.b32.xlu0 %v2158, 111
    %v2176 = vpop.permute.xlu0 %2175
    %2177 = vrot.lane.b32.xlu0 %v2159, 111
    %v2178 = vpop.permute.xlu0 %2177
    %2179 = vrot.lane.b32.xlu0 %v2160, 111
    %v2180 = vpop.permute.xlu0 %2179
    %2181 = vrot.lane.b32.xlu0 %v2161, 111
    %v2182 = vpop.permute.xlu0 %2181
    %2183 = vrot.lane.b32.xlu0 %v2162, 111
    %v2184 = vpop.permute.xlu0 %2183
    %2185 = vrot.lane.b32.xlu0 %v2163, 111
    %v2186 = vpop.permute.xlu0 %2185
    %2187 = vrot.lane.b32.xlu0 %v2164, 111
    %v2188 = vpop.permute.xlu0 %2187
    %vm2189 = vcmp.lt.s32.totalorder %v82, 111
    %v2190 = vsel %vm2189, %v2186, %v2188
    %v2191 = vsel %vm2189, %v2184, %v2186
    %v2192 = vsel %vm2189, %v2182, %v2184
    %v2193 = vsel %vm2189, %v2180, %v2182
    %v2194 = vsel %vm2189, %v2178, %v2180
    %v2195 = vsel %vm2189, %v2176, %v2178
    %v2196 = vsel %vm2189, %v2174, %v2176
    %v2197 = vsel %vm2189, %v2188, %v2174
    %s2198 = scalar_lea.vmem [#allocation2], 64
    %v2199 = vld [vmem:[%s2198] ss:$8 sm:$0xf]
    %v2200 = vld [vmem:[%s2198] ss:$8 sm:$0xf0]
    %v2201 = vor.u32 %v2199, %v2200
    %v2203 = vperm.slane %v2201, 0
    %v2204 = vperm.slane %v2201, 1
    %v2205 = vperm.slane %v2201, 2
    %v2206 = vperm.slane %v2201, 3
    %v2207 = vperm.slane %v2201, 4
    %v2208 = vperm.slane %v2201, 5
    %v2209 = vperm.slane %v2201, 6
    %v2210 = vperm.slane %v2201, 7
    %v2219 = vmul.f32 %v2196, %v2203
    %v2220 = vmul.f32 %v2195, %v2204
    %v2221 = vmul.f32 %v2194, %v2205
    %v2222 = vmul.f32 %v2193, %v2206
    %v2223 = vmul.f32 %v2192, %v2207
    %v2224 = vmul.f32 %v2191, %v2208
    %v2225 = vmul.f32 %v2190, %v2209
    %v2226 = vmul.f32 %v2197, %v2210
    %s2227 = scalar_lea.vmem %s1, 64
    %v2228 = vld [vmem:[%s2227] sm:$0xff]
    %v2230 = vsel %vm200, %v2228, 0
    %v2233 = vsel %vm204, %v2219, 0
    %v2236 = vsel %vm204, %v2220, 0
    %v2239 = vsel %vm204, %v2221, 0
    %v2242 = vsel %vm204, %v2222, 0
    %v2245 = vsel %vm204, %v2223, 0
    %v2248 = vsel %vm204, %v2224, 0
    %v2251 = vsel %vm204, %v2225, 0
    %v2254 = vsel %vm204, %v2226, 0
    %2256 = vmatpush.msra.mxu0 0.0
    %2257 = vmatpush.msra.mxu0 0.0
    %2258 = vmatpush.msra.mxu0 0.0
    %2259 = vmatpush.msra.mxu0 0.0
    %2260 = vmatpush.msra.mxu0 0.0
    %2261 = vmatpush.msra.mxu0 0.0
    %2262 = vmatpush.msra.mxu0 0.0
    %2263 = vmatpush.msra.mxu0 0.0
    %2264 = vmatpush.msra.mxu0 0.0
    %2265 = vmatpush.msra.mxu0 0.0
    %2266 = vmatpush.msra.mxu0 0.0
    %2267 = vmatpush.msra.mxu0 0.0
    %2268 = vmatpush.msra.mxu0 0.0
    %2269 = vmatpush.msra.mxu0 0.0
    %2270 = vmatpush.msra.mxu0 0.0
    %2271 = vmatpush.msra.mxu0 %v2233
    %2272 = vmatmul.f32.gmra.mxu0 %v2230
    %v2273 = vpop.f32.mrf.mxu0
    %v2274 = vadd.f32 0.0, %v2273
    %2275 = vdwg.mxu0
    %2276 = vmatpush.msra.mxu0 0.0
    %2277 = vmatpush.msra.mxu0 0.0
    %2278 = vmatpush.msra.mxu0 0.0
    %2279 = vmatpush.msra.mxu0 0.0
    %2280 = vmatpush.msra.mxu0 0.0
    %2281 = vmatpush.msra.mxu0 0.0
    %2282 = vmatpush.msra.mxu0 0.0
    %2283 = vmatpush.msra.mxu0 0.0
    %2284 = vmatpush.msra.mxu0 0.0
    %2285 = vmatpush.msra.mxu0 0.0
    %2286 = vmatpush.msra.mxu0 0.0
    %2287 = vmatpush.msra.mxu0 0.0
    %2288 = vmatpush.msra.mxu0 0.0
    %2289 = vmatpush.msra.mxu0 0.0
    %2290 = vmatpush.msra.mxu0 0.0
    %2291 = vmatpush.msra.mxu0 %v2236
    %2292 = vmatmul.f32.gmra.mxu0 %v2230
    %v2293 = vpop.f32.mrf.mxu0
    %v2294 = vadd.f32 0.0, %v2293
    %2295 = vdwg.mxu0
    %2296 = vmatpush.msra.mxu0 0.0
    %2297 = vmatpush.msra.mxu0 0.0
    %2298 = vmatpush.msra.mxu0 0.0
    %2299 = vmatpush.msra.mxu0 0.0
    %2300 = vmatpush.msra.mxu0 0.0
    %2301 = vmatpush.msra.mxu0 0.0
    %2302 = vmatpush.msra.mxu0 0.0
    %2303 = vmatpush.msra.mxu0 0.0
    %2304 = vmatpush.msra.mxu0 0.0
    %2305 = vmatpush.msra.mxu0 0.0
    %2306 = vmatpush.msra.mxu0 0.0
    %2307 = vmatpush.msra.mxu0 0.0
    %2308 = vmatpush.msra.mxu0 0.0
    %2309 = vmatpush.msra.mxu0 0.0
    %2310 = vmatpush.msra.mxu0 0.0
    %2311 = vmatpush.msra.mxu0 %v2239
    %2312 = vmatmul.f32.gmra.mxu0 %v2230
    %v2313 = vpop.f32.mrf.mxu0
    %v2314 = vadd.f32 0.0, %v2313
    %2315 = vdwg.mxu0
    %2316 = vmatpush.msra.mxu0 0.0
    %2317 = vmatpush.msra.mxu0 0.0
    %2318 = vmatpush.msra.mxu0 0.0
    %2319 = vmatpush.msra.mxu0 0.0
    %2320 = vmatpush.msra.mxu0 0.0
    %2321 = vmatpush.msra.mxu0 0.0
    %2322 = vmatpush.msra.mxu0 0.0
    %2323 = vmatpush.msra.mxu0 0.0
    %2324 = vmatpush.msra.mxu0 0.0
    %2325 = vmatpush.msra.mxu0 0.0
    %2326 = vmatpush.msra.mxu0 0.0
    %2327 = vmatpush.msra.mxu0 0.0
    %2328 = vmatpush.msra.mxu0 0.0
    %2329 = vmatpush.msra.mxu0 0.0
    %2330 = vmatpush.msra.mxu0 0.0
    %2331 = vmatpush.msra.mxu0 %v2242
    %2332 = vmatmul.f32.gmra.mxu0 %v2230
    %v2333 = vpop.f32.mrf.mxu0
    %v2334 = vadd.f32 0.0, %v2333
    %2335 = vdwg.mxu0
    %2336 = vmatpush.msra.mxu0 0.0
    %2337 = vmatpush.msra.mxu0 0.0
    %2338 = vmatpush.msra.mxu0 0.0
    %2339 = vmatpush.msra.mxu0 0.0
    %2340 = vmatpush.msra.mxu0 0.0
    %2341 = vmatpush.msra.mxu0 0.0
    %2342 = vmatpush.msra.mxu0 0.0
    %2343 = vmatpush.msra.mxu0 0.0
    %2344 = vmatpush.msra.mxu0 0.0
    %2345 = vmatpush.msra.mxu0 0.0
    %2346 = vmatpush.msra.mxu0 0.0
    %2347 = vmatpush.msra.mxu0 0.0
    %2348 = vmatpush.msra.mxu0 0.0
    %2349 = vmatpush.msra.mxu0 0.0
    %2350 = vmatpush.msra.mxu0 0.0
    %2351 = vmatpush.msra.mxu0 %v2245
    %2352 = vmatmul.f32.gmra.mxu0 %v2230
    %v2353 = vpop.f32.mrf.mxu0
    %v2354 = vadd.f32 0.0, %v2353
    %2355 = vdwg.mxu0
    %2356 = vmatpush.msra.mxu0 0.0
    %2357 = vmatpush.msra.mxu0 0.0
    %2358 = vmatpush.msra.mxu0 0.0
    %2359 = vmatpush.msra.mxu0 0.0
    %2360 = vmatpush.msra.mxu0 0.0
    %2361 = vmatpush.msra.mxu0 0.0
    %2362 = vmatpush.msra.mxu0 0.0
    %2363 = vmatpush.msra.mxu0 0.0
    %2364 = vmatpush.msra.mxu0 0.0
    %2365 = vmatpush.msra.mxu0 0.0
    %2366 = vmatpush.msra.mxu0 0.0
    %2367 = vmatpush.msra.mxu0 0.0
    %2368 = vmatpush.msra.mxu0 0.0
    %2369 = vmatpush.msra.mxu0 0.0
    %2370 = vmatpush.msra.mxu0 0.0
    %2371 = vmatpush.msra.mxu0 %v2248
    %2372 = vmatmul.f32.gmra.mxu0 %v2230
    %v2373 = vpop.f32.mrf.mxu0
    %v2374 = vadd.f32 0.0, %v2373
    %2375 = vdwg.mxu0
    %2376 = vmatpush.msra.mxu0 0.0
    %2377 = vmatpush.msra.mxu0 0.0
    %2378 = vmatpush.msra.mxu0 0.0
    %2379 = vmatpush.msra.mxu0 0.0
    %2380 = vmatpush.msra.mxu0 0.0
    %2381 = vmatpush.msra.mxu0 0.0
    %2382 = vmatpush.msra.mxu0 0.0
    %2383 = vmatpush.msra.mxu0 0.0
    %2384 = vmatpush.msra.mxu0 0.0
    %2385 = vmatpush.msra.mxu0 0.0
    %2386 = vmatpush.msra.mxu0 0.0
    %2387 = vmatpush.msra.mxu0 0.0
    %2388 = vmatpush.msra.mxu0 0.0
    %2389 = vmatpush.msra.mxu0 0.0
    %2390 = vmatpush.msra.mxu0 0.0
    %2391 = vmatpush.msra.mxu0 %v2251
    %2392 = vmatmul.f32.gmra.mxu0 %v2230
    %v2393 = vpop.f32.mrf.mxu0
    %v2394 = vadd.f32 0.0, %v2393
    %2395 = vdwg.mxu0
    %2396 = vmatpush.msra.mxu0 0.0
    %2397 = vmatpush.msra.mxu0 0.0
    %2398 = vmatpush.msra.mxu0 0.0
    %2399 = vmatpush.msra.mxu0 0.0
    %2400 = vmatpush.msra.mxu0 0.0
    %2401 = vmatpush.msra.mxu0 0.0
    %2402 = vmatpush.msra.mxu0 0.0
    %2403 = vmatpush.msra.mxu0 0.0
    %2404 = vmatpush.msra.mxu0 0.0
    %2405 = vmatpush.msra.mxu0 0.0
    %2406 = vmatpush.msra.mxu0 0.0
    %2407 = vmatpush.msra.mxu0 0.0
    %2408 = vmatpush.msra.mxu0 0.0
    %2409 = vmatpush.msra.mxu0 0.0
    %2410 = vmatpush.msra.mxu0 0.0
    %2411 = vmatpush.msra.mxu0 %v2254
    %2412 = vmatmul.f32.gmra.mxu0 %v2230
    %v2413 = vpop.f32.mrf.mxu0
    %v2414 = vadd.f32 0.0, %v2413
    %2415 = vdwg.mxu0
    %v2416 = vadd.f32 %v2142, %v2274
    %v2417 = vadd.f32 %v2143, %v2294
    %v2418 = vadd.f32 %v2144, %v2314
    %v2419 = vadd.f32 %v2145, %v2334
    %v2420 = vadd.f32 %v2146, %v2354
    %v2421 = vadd.f32 %v2147, %v2374
    %v2422 = vadd.f32 %v2148, %v2394
    %v2423 = vadd.f32 %v2149, %v2414
    %v2424 = vld [vmem:[%s2] sm:$0xff]
    %2426 = vset.pattern.permute.xlu0 0
    %2427 = vperm.xlu0 %2426, %v2424
    %v2428 = vpop.permute.xlu0 %2427
    %v2430 = vadd.f32 %v2416, %v2428
    %v2431 = vadd.f32 %v2417, %v2428
    %v2432 = vadd.f32 %v2418, %v2428
    %v2433 = vadd.f32 %v2419, %v2428
    %v2434 = vadd.f32 %v2420, %v2428
    %v2435 = vadd.f32 %v2421, %v2428
    %v2436 = vadd.f32 %v2422, %v2428
    %v2437 = vadd.f32 %v2423, %v2428
    %v2438 = vmax.f32 %v2430, 0.0
    %v2439 = vmax.f32 %v2431, 0.0
    %v2440 = vmax.f32 %v2432, 0.0
    %v2441 = vmax.f32 %v2433, 0.0
    %v2442 = vmax.f32 %v2434, 0.0
    %v2443 = vmax.f32 %v2435, 0.0
    %v2444 = vmax.f32 %v2436, 0.0
    %v2445 = vmax.f32 %v2437, 0.0
    %2446 = vst [vmem:[#allocation5] sm:$0xff] %v2438
    %2447 = vst [vmem:[#allocation5 + $0x8] sm:$0xff] %v2439
    %2448 = vst [vmem:[#allocation5 + $0x10] sm:$0xff] %v2440
    %2449 = vst [vmem:[#allocation5 + $0x18] sm:$0xff] %v2441
    %2450 = vst [vmem:[#allocation5 + $0x20] sm:$0xff] %v2442
    %2451 = vst [vmem:[#allocation5 + $0x28] sm:$0xff] %v2443
    %2452 = vst [vmem:[#allocation5 + $0x30] sm:$0xff] %v2444
    %2453 = vst [vmem:[#allocation5 + $0x38] sm:$0xff] %v2445
    // Predicated region
    $region22: #{tpu_custom_call.1} parent=1 // pred_check
      _
    $region23: #{tpu_custom_call.1} parent=1 // pred_check_branch
      %2455 = sbr.rel (0) target = $region25
    $region24: #{tpu_custom_call.1} parent=1 // pred_region
      %2457 = vsyncadd [#allocation4], 0
      %s2459 = sshll.u32 [#allocation5], 4
      %s2460 = int_to_ptr.vmem [resolvable:$true] %s2459
      %s2461 = sshll.u32 %s4, 4
      %s2462 = int_to_ptr.hbm [resolvable:$true] %s2461
      %2464 = dma.vmem_to_hbm [thread:$0]  %s2460, 1024, %s2462, [#allocation4]
    $region25: #{tpu_custom_call.1} parent=1 // pred_fallthru
      _
    // Predicated region
    $region26: #{tpu_custom_call.1} parent=1 // pred_check
      _
    $region27: #{tpu_custom_call.1} parent=1 // pred_check_branch
      %2466 = sbr.rel (0) target = $region29
    $region28: #{tpu_custom_call.1} parent=1 // pred_region
      %2468 = dma.done [#allocation4], 1024
    $region29: #{tpu_custom_call.1} parent=1 // pred_fallthru
      _
    %2469 = vsyncpa [#allocation3], 1
    %2470 = vsyncpa [#allocation4], 1

</llo_original>
